<compile_context>
chip_gen: v7x
topology: tpu7x:2x2x1
jax: 0.10.0
libtpu: 0.0.40
codegen_flags: <defaults>
</compile_context>

<pallas_src>
from functools import partial

import jax
import jax.numpy as jnp
from jax import lax
from jax.experimental import pallas as pl
from jax.experimental.pallas import tpu as pltpu

E = 13            # len(ENCODED_VALUES)
L = 53            # game_encoded: 52 predictor slots + 1 current card
FC_IN = 8 * E     # 104 = 1*E (card preds) + 6*E (own deck) + 1*E (current)
H1, H2 = 30, 15
TB = 512          # batch tile (lanes per grid step)
PR = 224          # packed-parameter slab rows (all sub-views 8-aligned)


def draw_action_kernel(gT_ref, p_ref, out_ref):
    f32 = jnp.float32
    gT = gT_ref[...]                      # (L, tb) int8, batch on lanes
    tb = gT.shape[1]
    gT_f = gT.astype(f32)                 # single int8->f32 VPU pass

    # ---- 8-aligned static views into the packed parameter slab --------------
    wcp_t = p_ref[0:16, 0:53]     # (16, 53): rows 0..12 real, col 52 zero
    bcp_c = p_ref[0:16, 56:57]    # (16, 1)
    w1_t = p_ref[128:160, :]      # (32, 128): rows 0..29 / cols 0..103 real
    b1_c = p_ref[160:192, 0:1]    # (32, 1)
    w2_t = p_ref[192:208, 0:32]   # (16, 32): rows 0..14 / cols 0..29 real
    b2_c = p_ref[192:208, 32:33]  # (16, 1)
    w3_c = p_ref[208:224, 0:1]    # (16, 1): rows 0..14 real
    b3 = p_ref[208:209, 1:2]      # (1, 1)

    # ---- card_predictor(game_encoded[:52]) on a 16-row slice ----------------
    # TODO(synk): real `card_predictor` architecture is external/unknown;
    # modeled here as Linear(52, E) + softmax.  Weight col 52 is zero so the
    # current-card row of gT_f does not leak into the predictor.
    logitsT = jnp.dot(wcp_t, gT_f, preferred_element_type=f32) + bcp_c  # (16, tb)
    row16 = lax.broadcasted_iota(jnp.int32, (16, tb), 0)
    logitsT = jnp.where(row16 < E, logitsT, -1e30)           # mask 3 padded rows
    m = jnp.max(logitsT, axis=0, keepdims=True)              # (1, tb)
    ex = jnp.exp(logitsT - m)                                 # padded rows -> 0
    denom = jnp.sum(ex, axis=0, keepdims=True)                # (1, tb)
    card_predT = ex * pl.reciprocal(denom, approx=True)       # (16, tb)

    # ---- one-hot blocks (own deck = game[:6], current = game[-1]) -----------
    # bool OR-accumulation; values outside [0, E) silently give a zero row.
    row_i = lax.broadcasted_iota(jnp.int32, (128, tb), 0)
    hit = None
    for k, c in enumerate((0, 1, 2, 3, 4, 5, L - 1)):
        tgt = E * (k + 1) + gT_f[c:c + 1, :].astype(jnp.int32)   # (1, tb)
        eq = row_i == tgt
        hit = eq if hit is None else jnp.logical_or(hit, eq)

    # lane-padded combined activation: rows 0..12 card_pred, 13..103 one-hots,
    # rows 104..127 zero.  One 8-aligned concat + ONE select (no extra casts).
    card_pad = jnp.concatenate(
        [card_predT, jnp.zeros((128 - 16, tb), f32)], axis=0)    # (128, tb)
    combinedT = jnp.where(hit, f32(1.0), card_pad)               # (128, tb)

    # ---- fc_stack: Linear(104,30)+ReLU, Linear(30,15)+ReLU, Linear(15,1)+Tanh
    h1T = jnp.maximum(
        jnp.dot(w1_t, combinedT, preferred_element_type=f32) + b1_c, 0.0)  # (32, tb)
    h2T = jnp.maximum(
        jnp.dot(w2_t, h1T, preferred_element_type=f32) + b2_c, 0.0)        # (16, tb)
    # final 15->1 layer on VPU + sublane reduce (keeps the tiny dot off the MXU)
    yT = jnp.tanh(jnp.sum(h2T * w3_c, axis=0, keepdims=True) + b3)         # (1, tb)
    out_ref[...] = yT


def init_params():
    keys = jax.random.split(jax.random.PRNGKey(42), 8)
    s = 0.1
    return {
        # torch nn.Linear orientation: weight is (out_features, in_features)
        "wcp_w": s * jax.random.normal(keys[0], (E, 52), jnp.float32),
        "wcp_b": s * jax.random.normal(keys[1], (E,), jnp.float32),
        "fc1_w": s * jax.random.normal(keys[2], (H1, FC_IN), jnp.float32),
        "fc1_b": s * jax.random.normal(keys[3], (H1,), jnp.float32),
        "fc2_w": s * jax.random.normal(keys[4], (H2, H1), jnp.float32),
        "fc2_b": s * jax.random.normal(keys[5], (H2,), jnp.float32),
        "fc3_w": s * jax.random.normal(keys[6], (1, H2), jnp.float32),
        "fc3_b": s * jax.random.normal(keys[7], (1,), jnp.float32),
    }


def pack_params(p):
    """Pack all parameters into one lane-padded (PR, 128) f32 slab (1 DMA).

    Every sub-block starts on an 8-row boundary and unused rows/lanes are zero
    so the 8-aligned kernel views are numerically exact.
    """
    slab = jnp.zeros((PR, 128), jnp.float32)
    slab = slab.at[0:E, 0:52].set(p["wcp_w"])
    slab = slab.at[0:E, 56].set(p["wcp_b"])
    slab = slab.at[128:128 + H1, 0:FC_IN].set(p["fc1_w"])
    slab = slab.at[160:160 + H1, 0].set(p["fc1_b"])
    slab = slab.at[192:192 + H2, 0:H1].set(p["fc2_w"])
    slab = slab.at[192:192 + H2, 32].set(p["fc2_b"])
    slab = slab.at[208:208 + H2, 0].set(p["fc3_w"].reshape(H2))
    slab = slab.at[208, 1].set(p["fc3_b"][0])
    return slab


@partial(jax.jit, static_argnames=("tb",))
def draw_action_forward_batch(game_batch, param_slab, tb=TB):
    """game_batch: (B, L) integer card codes -> (B,) tanh outputs."""
    B = game_batch.shape[0]
    n_tiles = max(1, pl.cdiv(B, tb))
    Bp = n_tiles * tb
    # int8 end-to-end: 4x less HBM traffic, 4x cheaper transpose than f32.
    g8 = game_batch.astype(jnp.int8)
    if Bp != B:
        g8 = jnp.concatenate([g8, jnp.zeros((Bp - B, L), jnp.int8)], axis=0)
    gT = g8.T                                            # (L, Bp): batch on lanes

    cost = pl.CostEstimate(
        flops=Bp * 12000,
        transcendentals=Bp * 17,                         # 16 exp + 1 tanh / sample
        bytes_accessed=Bp * (L + 4) + PR * 128 * 4,
    )

    out = pl.pallas_call(
        draw_action_kernel,
        out_shape=jax.ShapeDtypeStruct((1, Bp), jnp.float32),
        grid=(n_tiles,),
        in_specs=[
            pl.BlockSpec((L, tb), lambda i: (0, i)),     # per-tile int8 batch slab
            pl.BlockSpec((PR, 128), lambda i: (0, 0)),   # params: fetched once
        ],
        out_specs=pl.BlockSpec((1, tb), lambda i: (0, i)),  # lane-dense output
        compiler_params=pltpu.CompilerParams(
            dimension_semantics=("parallel",)),
        cost_estimate=cost,
    )(gT, param_slab)
    return out[0, :B]


def draw_action_forward(game_encoded, param_slab):
    """Single game state (L,) -> (1,), matching the torch module's output.

    Uses a small 128-lane tile to cut padding waste on the latency path.
    """
    return draw_action_forward_batch(game_encoded.reshape(1, L), param_slab, tb=128)


def reference_forward(game_encoded, p):
    """Pure-JAX replica of the PyTorch forward for validation (single sample)."""
    g = game_encoded.astype(jnp.float32)
    logits = p["wcp_w"] @ g[:52] + p["wcp_b"]
    card_pred = jax.nn.softmax(logits)                               # (E,)
    own_deck = jax.nn.one_hot(g[:6].astype(jnp.int32), E)            # (6, E)
    current = jax.nn.one_hot(g[-1].astype(jnp.int32), E)             # (E,)
    combined = jnp.concatenate(
        [card_pred[None, :], own_deck, current[None, :]], axis=0).reshape(-1)
    h1 = jax.nn.relu(p["fc1_w"] @ combined + p["fc1_b"])
    h2 = jax.nn.relu(p["fc2_w"] @ h1 + p["fc2_b"])
    return jnp.tanh(p["fc3_w"] @ h2 + p["fc3_b"])                    # (1,)


if __name__ == "__main__":
    params = init_params()
    slab = pack_params(params)

    B = 600   # -> 2 grid tiles of 512 (exercises padding and multi-tile path)
    key = jax.random.PRNGKey(0)
    games = jax.random.randint(key, (B, L), 0, E, dtype=jnp.int32)

    out = jax.block_until_ready(draw_action_forward_batch(games, slab))
    assert out.shape == (B,)

    ref = jax.vmap(lambda g: reference_forward(g, params))(
        games.astype(jnp.float32))[:, 0]
    max_err = float(jnp.max(jnp.abs(out - ref)))
    assert jnp.allclose(out, ref, atol=2e-3), max_err

    # single-sample (latency) path: pads up to one 128-lane tile
    single = jax.block_until_ready(draw_action_forward(games[0], slab))
    assert single.shape == (1,)
    assert jnp.allclose(single, ref[0:1], atol=2e-3)

    print("KERNEL_OK")
</pallas_src>

<mosaic_0001>
module attributes {stable_mosaic.version = 11 : i64} {
  func.func @draw_action_kernel(%arg0: i32, %arg1: memref<53x512xi8, #tpu.memory_space<vmem>>, %arg2: memref<224x128xf32, #tpu.memory_space<vmem>>, %arg3: memref<1x512xf32, #tpu.memory_space<vmem>>) attributes {dimension_semantics = [#tpu.dimension_semantics<parallel>], iteration_bounds = array<i64: 2>, scalar_prefetch = 0 : i64, scratch_operands = 0 : i64, tpu.core_type = #tpu.core_type<tc>, window_params = [{transform_indices = @transform_0, window_bounds = array<i64: 53, 512>}, {pipeline_mode = #tpu.pipeline_mode<synchronous>, transform_indices = @transform_1, window_bounds = array<i64: 224, 128>}, {transform_indices = @transform_2, window_bounds = array<i64: 1, 512>}]} {
    %c0 = arith.constant 0 : index
    %c0_0 = arith.constant 0 : index
    %0 = vector.load %arg1[%c0, %c0_0] : memref<53x512xi8, #tpu.memory_space<vmem>>, vector<53x512xi8>
    %1 = arith.sitofp %0 : vector<53x512xi8> to vector<53x512xf32>
    %c0_1 = arith.constant 0 : index
    %c0_2 = arith.constant 0 : index
    %2 = vector.load %arg2[%c0_1, %c0_2] : memref<224x128xf32, #tpu.memory_space<vmem>>, vector<16x53xf32>
    %c0_3 = arith.constant 0 : index
    %c56 = arith.constant 56 : index
    %3 = vector.load %arg2[%c0_3, %c56] : memref<224x128xf32, #tpu.memory_space<vmem>>, vector<16x1xf32>
    %c128 = arith.constant 128 : index
    %c0_4 = arith.constant 0 : index
    %4 = vector.load %arg2[%c128, %c0_4] : memref<224x128xf32, #tpu.memory_space<vmem>>, vector<32x128xf32>
    %c160 = arith.constant 160 : index
    %c0_5 = arith.constant 0 : index
    %5 = vector.load %arg2[%c160, %c0_5] : memref<224x128xf32, #tpu.memory_space<vmem>>, vector<32x1xf32>
    %c192 = arith.constant 192 : index
    %c0_6 = arith.constant 0 : index
    %6 = vector.load %arg2[%c192, %c0_6] : memref<224x128xf32, #tpu.memory_space<vmem>>, vector<16x32xf32>
    %c192_7 = arith.constant 192 : index
    %c32 = arith.constant 32 : index
    %7 = vector.load %arg2[%c192_7, %c32] : memref<224x128xf32, #tpu.memory_space<vmem>>, vector<16x1xf32>
    %c208 = arith.constant 208 : index
    %c0_8 = arith.constant 0 : index
    %8 = vector.load %arg2[%c208, %c0_8] : memref<224x128xf32, #tpu.memory_space<vmem>>, vector<16x1xf32>
    %c208_9 = arith.constant 208 : index
    %c1 = arith.constant 1 : index
    %9 = vector.load %arg2[%c208_9, %c1] : memref<224x128xf32, #tpu.memory_space<vmem>>, vector<1x1xf32>
    %cst = arith.constant dense<0.000000e+00> : vector<16x512xf32>
    %10 = tpu.matmul %2, %1, %cst {dimension_numbers = #tpu.dot_dimension_numbers<[1], [0], [0], [1], [0, 0, 1, 1], [], []>} : vector<16x53xf32>, vector<53x512xf32>, vector<16x512xf32> -> vector<16x512xf32>
    %11 = vector.broadcast %3 : vector<16x1xf32> to vector<16x512xf32>
    %12 = arith.addf %10, %11 : vector<16x512xf32>
    %13 = tpu.iota {dimensions = array<i32: 0>} : vector<16x512xi32>
    %c13_i32 = arith.constant 13 : i32
    %14 = vector.broadcast %c13_i32 : i32 to vector<16x512xi32>
    %15 = arith.cmpi slt, %13, %14 : vector<16x512xi32>
    %cst_10 = arith.constant -1.000000e+30 : f32
    %16 = vector.broadcast %cst_10 : f32 to vector<16x512xf32>
    %17 = arith.select %15, %12, %16 : vector<16x512xi1>, vector<16x512xf32>
    %cst_11 = arith.constant dense<0xFF800000> : vector<512xf32>
    %18 = vector.multi_reduction <maximumf>, %17, %cst_11 [0] : vector<16x512xf32> to vector<512xf32>
    %19 = vector.shape_cast %18 : vector<512xf32> to vector<1x512xf32>
    %20 = vector.broadcast %19 : vector<1x512xf32> to vector<16x512xf32>
    %21 = arith.subf %17, %20 : vector<16x512xf32>
    %22 = math.exp %21 : vector<16x512xf32>
    %cst_12 = arith.constant dense<0.000000e+00> : vector<512xf32>
    %23 = vector.multi_reduction <add>, %22, %cst_12 [0] : vector<16x512xf32> to vector<512xf32>
    %24 = vector.shape_cast %23 : vector<512xf32> to vector<1x512xf32>
    %25 = tpu.reciprocal %24 {approx = true} : vector<1x512xf32> -> vector<1x512xf32>
    %26 = vector.broadcast %25 : vector<1x512xf32> to vector<16x512xf32>
    %27 = arith.mulf %22, %26 : vector<16x512xf32>
    %28 = tpu.iota {dimensions = array<i32: 0>} : vector<128x512xi32>
    %29 = vector.extract_strided_slice %1 {offsets = [0, 0], sizes = [1, 512], strides = [1, 1]} : vector<53x512xf32> to vector<1x512xf32>
    %30 = arith.fptosi %29 : vector<1x512xf32> to vector<1x512xi32>
    %c13_i32_13 = arith.constant 13 : i32
    %31 = vector.broadcast %c13_i32_13 : i32 to vector<1x512xi32>
    %32 = arith.addi %31, %30 : vector<1x512xi32>
    %33 = vector.broadcast %32 : vector<1x512xi32> to vector<128x512xi32>
    %34 = arith.cmpi eq, %28, %33 : vector<128x512xi32>
    %35 = vector.extract_strided_slice %1 {offsets = [1, 0], sizes = [1, 512], strides = [1, 1]} : vector<53x512xf32> to vector<1x512xf32>
    %36 = arith.fptosi %35 : vector<1x512xf32> to vector<1x512xi32>
    %c26_i32 = arith.constant 26 : i32
    %37 = vector.broadcast %c26_i32 : i32 to vector<1x512xi32>
    %38 = arith.addi %37, %36 : vector<1x512xi32>
    %39 = vector.broadcast %38 : vector<1x512xi32> to vector<128x512xi32>
    %40 = arith.cmpi eq, %28, %39 : vector<128x512xi32>
    %41 = arith.ori %34, %40 : vector<128x512xi1>
    %42 = vector.extract_strided_slice %1 {offsets = [2, 0], sizes = [1, 512], strides = [1, 1]} : vector<53x512xf32> to vector<1x512xf32>
    %43 = arith.fptosi %42 : vector<1x512xf32> to vector<1x512xi32>
    %c39_i32 = arith.constant 39 : i32
    %44 = vector.broadcast %c39_i32 : i32 to vector<1x512xi32>
    %45 = arith.addi %44, %43 : vector<1x512xi32>
    %46 = vector.broadcast %45 : vector<1x512xi32> to vector<128x512xi32>
    %47 = arith.cmpi eq, %28, %46 : vector<128x512xi32>
    %48 = arith.ori %41, %47 : vector<128x512xi1>
    %49 = vector.extract_strided_slice %1 {offsets = [3, 0], sizes = [1, 512], strides = [1, 1]} : vector<53x512xf32> to vector<1x512xf32>
    %50 = arith.fptosi %49 : vector<1x512xf32> to vector<1x512xi32>
    %c52_i32 = arith.constant 52 : i32
    %51 = vector.broadcast %c52_i32 : i32 to vector<1x512xi32>
    %52 = arith.addi %51, %50 : vector<1x512xi32>
    %53 = vector.broadcast %52 : vector<1x512xi32> to vector<128x512xi32>
    %54 = arith.cmpi eq, %28, %53 : vector<128x512xi32>
    %55 = arith.ori %48, %54 : vector<128x512xi1>
    %56 = vector.extract_strided_slice %1 {offsets = [4, 0], sizes = [1, 512], strides = [1, 1]} : vector<53x512xf32> to vector<1x512xf32>
    %57 = arith.fptosi %56 : vector<1x512xf32> to vector<1x512xi32>
    %c65_i32 = arith.constant 65 : i32
    %58 = vector.broadcast %c65_i32 : i32 to vector<1x512xi32>
    %59 = arith.addi %58, %57 : vector<1x512xi32>
    %60 = vector.broadcast %59 : vector<1x512xi32> to vector<128x512xi32>
    %61 = arith.cmpi eq, %28, %60 : vector<128x512xi32>
    %62 = arith.ori %55, %61 : vector<128x512xi1>
    %63 = vector.extract_strided_slice %1 {offsets = [5, 0], sizes = [1, 512], strides = [1, 1]} : vector<53x512xf32> to vector<1x512xf32>
    %64 = arith.fptosi %63 : vector<1x512xf32> to vector<1x512xi32>
    %c78_i32 = arith.constant 78 : i32
    %65 = vector.broadcast %c78_i32 : i32 to vector<1x512xi32>
    %66 = arith.addi %65, %64 : vector<1x512xi32>
    %67 = vector.broadcast %66 : vector<1x512xi32> to vector<128x512xi32>
    %68 = arith.cmpi eq, %28, %67 : vector<128x512xi32>
    %69 = arith.ori %62, %68 : vector<128x512xi1>
    %70 = vector.extract_strided_slice %1 {offsets = [52, 0], sizes = [1, 512], strides = [1, 1]} : vector<53x512xf32> to vector<1x512xf32>
    %71 = arith.fptosi %70 : vector<1x512xf32> to vector<1x512xi32>
    %c91_i32 = arith.constant 91 : i32
    %72 = vector.broadcast %c91_i32 : i32 to vector<1x512xi32>
    %73 = arith.addi %72, %71 : vector<1x512xi32>
    %74 = vector.broadcast %73 : vector<1x512xi32> to vector<128x512xi32>
    %75 = arith.cmpi eq, %28, %74 : vector<128x512xi32>
    %76 = arith.ori %69, %75 : vector<128x512xi1>
    %cst_14 = arith.constant 0.000000e+00 : f32
    %77 = vector.broadcast %cst_14 : f32 to vector<112x512xf32>
    %78 = tpu.concatenate %27, %77 in 0 : vector<16x512xf32>, vector<112x512xf32> -> vector<128x512xf32>
    %cst_15 = arith.constant 1.000000e+00 : f32
    %79 = vector.broadcast %cst_15 : f32 to vector<128x512xf32>
    %80 = arith.select %76, %79, %78 : vector<128x512xi1>, vector<128x512xf32>
    %cst_16 = arith.constant dense<0.000000e+00> : vector<32x512xf32>
    %81 = tpu.matmul %4, %80, %cst_16 {dimension_numbers = #tpu.dot_dimension_numbers<[1], [0], [0], [1], [0, 0, 1, 1], [], []>} : vector<32x128xf32>, vector<128x512xf32>, vector<32x512xf32> -> vector<32x512xf32>
    %82 = vector.broadcast %5 : vector<32x1xf32> to vector<32x512xf32>
    %83 = arith.addf %81, %82 : vector<32x512xf32>
    %cst_17 = arith.constant 0.000000e+00 : f32
    %84 = vector.broadcast %cst_17 : f32 to vector<32x512xf32>
    %85 = arith.maximumf %83, %84 : vector<32x512xf32>
    %cst_18 = arith.constant dense<0.000000e+00> : vector<16x512xf32>
    %86 = tpu.matmul %6, %85, %cst_18 {dimension_numbers = #tpu.dot_dimension_numbers<[1], [0], [0], [1], [0, 0, 1, 1], [], []>} : vector<16x32xf32>, vector<32x512xf32>, vector<16x512xf32> -> vector<16x512xf32>
    %87 = vector.broadcast %7 : vector<16x1xf32> to vector<16x512xf32>
    %88 = arith.addf %86, %87 : vector<16x512xf32>
    %cst_19 = arith.constant 0.000000e+00 : f32
    %89 = vector.broadcast %cst_19 : f32 to vector<16x512xf32>
    %90 = arith.maximumf %88, %89 : vector<16x512xf32>
    %91 = vector.broadcast %8 : vector<16x1xf32> to vector<16x512xf32>
    %92 = arith.mulf %90, %91 : vector<16x512xf32>
    %cst_20 = arith.constant dense<0.000000e+00> : vector<512xf32>
    %93 = vector.multi_reduction <add>, %92, %cst_20 [0] : vector<16x512xf32> to vector<512xf32>
    %94 = vector.shape_cast %93 : vector<512xf32> to vector<1x512xf32>
    %95 = vector.broadcast %9 : vector<1x1xf32> to vector<1x512xf32>
    %96 = arith.addf %94, %95 : vector<1x512xf32>
    %97 = math.tanh %96 : vector<1x512xf32>
    %c0_21 = arith.constant 0 : index
    %c0_22 = arith.constant 0 : index
    %98 = vector.load %arg3[%c0_21, %c0_22] : memref<1x512xf32, #tpu.memory_space<vmem>>, vector<1x512xf32>
    tpu.vector_store %arg3[%c0_21, %c0_22], %97 {strides = array<i32>} : memref<1x512xf32, #tpu.memory_space<vmem>>, vector<1x512xf32>,
    return
  }
  func.func @transform_0(%arg0: i32) -> (i32, i32) {
    %c0_i32 = arith.constant 0 : i32
    %c0_i32_0 = arith.constant 0 : i32
    return %c0_i32, %arg0 : i32, i32
  }
  func.func @transform_1(%arg0: i32) -> (i32, i32) {
    %c0_i32 = arith.constant 0 : i32
    %c0_i32_0 = arith.constant 0 : i32
    %c0_i32_1 = arith.constant 0 : i32
    return %c0_i32, %c0_i32_0 : i32, i32
  }
  func.func @transform_2(%arg0: i32) -> (i32, i32) {
    %c0_i32 = arith.constant 0 : i32
    %c0_i32_0 = arith.constant 0 : i32
    return %c0_i32, %arg0 : i32, i32
  }
}

</mosaic_0001>

<llo_original>
// kernel: draw_action_forward_batch.1
$region0: #{draw_action_forward_batch.1}
  #allocation0 [shape = 'u32[]', space=smem, size = 0x4, offset = 0x4, fixed_abs, tag = 'smem constant byte address 0x4 - core index']
  #allocation1 [shape = 'u32[144,128]{1,0:T(1,128)}', space=vmem, size = 0x12000, scoped, tag = 'internal scratch']
  %s0 = inlined_call_operand.vmem [shape: s8[53,1024], index: 0, kind: input, shape index: {}]
  %s1 = inlined_call_operand.vmem [shape: f32[224,128], index: 1, kind: input, shape index: {}]
  %s2 = inlined_call_operand.vmem [shape: f32[1,1024], index: 2, kind: output, shape index: {}]
  %s3 = sld [smem:[#allocation0]]
  $region79: #{draw_action_forward_batch.1} parent=0
    _
  %s5 = ssub.s32 1, %s3
  %s6 = scalar_select 0, %s5, %s3
  $region1: #{draw_action_forward_batch.1} parent=0
    #allocation2 [shape = 'u8[57344]{0}', space=vmem, size = 0xe000, scoped, tag = 'input window, operand 0']
    loop: start=0, step=1, limit=4
    $region2: #{draw_action_forward_batch.1} parent=1 // loop_pre_header
      _
    $region3: #{draw_action_forward_batch.1} parent=1 // loop_header
      %s8 = sphi 0, %s12
      %p9 = scmp.ge.s32.totalorder %s8, 4
      %s18 = sphi 0, %s20
      %s21 = sphi 0, %s18
      %s22 = sphi 0, %s21
      %s38 = sphi 0, %s22
      %s42 = sphi 0, %s42
      %s44 = sphi 0, %s42
      %s45 = sphi 0, %s44
      %s59 = sphi 0, %s45
      %s65 = sphi 0, %s67
      %s68 = sphi 0, %s65
      %s69 = sphi 0, %s68
      %s85 = sphi 0, %s69
    $region4: #{draw_action_forward_batch.1} parent=1 // loop_header_branch
      %11 = sbr.rel (%p9) target = $region8
    $region5: #{draw_action_forward_batch.1} parent=1 // loop_body
      %s13 = ssub.s32 %s8, 1
      %s14 = ssub.s32 %s8, 2
      %s15 = sadd.s32 %s8, 1
      %s16 = ssub.s32 %s8, %s15
      %p17 = scmp.eq.s32.totalorder %s16, 0
      %s19 = sadd.s32 %s18, 1
      %s20 = scalar_select %p17, %s18, %s19
      %p23 = pneg %p17
      %p24 = scmp.eq.s32.totalorder %s8, 1
      %p25 = por %p23, %p24
      %p26 = scmp.ne.s32.totalorder %s18, %s21
      %p27 = scmp.eq.s32.totalorder %s8, 0
      %p28 = por %p26, %p27
      %p29 = scmp.ne.s32.totalorder %s18, %s21
      %p30 = scmp.eq.s32.totalorder %s13, 1
      %p31 = por %p29, %p30
      %p32 = scmp.ne.s32.totalorder %s21, %s22
      %p33 = scmp.eq.s32.totalorder %s13, 0
      %p34 = por %p32, %p33
      %p35 = scmp.ne.s32.totalorder %s21, %s22
      %p36 = scmp.eq.s32.totalorder %s14, 1
      %p37 = por %p35, %p36
      %p39 = scmp.ne.s32.totalorder %s22, %s38
      %p40 = scmp.eq.s32.totalorder %s14, 0
      %p41 = por %p39, %p40
      %s43 = sadd.s32 %s42, 1
      %p46 = scmp.eq.s32.totalorder %s8, 1
      %p47 = scmp.ne.s32.totalorder %s42, %s44
      %p48 = scmp.eq.s32.totalorder %s8, 0
      %p49 = por %p47, %p48
      %p50 = scmp.ne.s32.totalorder %s42, %s44
      %p51 = scmp.eq.s32.totalorder %s13, 1
      %p52 = por %p50, %p51
      %p53 = scmp.ne.s32.totalorder %s44, %s45
      %p54 = scmp.eq.s32.totalorder %s13, 0
      %p55 = por %p53, %p54
      %p56 = scmp.ne.s32.totalorder %s44, %s45
      %p57 = scmp.eq.s32.totalorder %s14, 1
      %p58 = por %p56, %p57
      %p60 = scmp.ne.s32.totalorder %s45, %s59
      %p61 = scmp.eq.s32.totalorder %s14, 0
      %p62 = por %p60, %p61
      %s63 = ssub.s32 %s8, %s15
      %p64 = scmp.eq.s32.totalorder %s63, 0
      %s66 = sadd.s32 %s65, 1
      %s67 = scalar_select %p64, %s65, %s66
      %p70 = pneg %p64
      %p71 = scmp.eq.s32.totalorder %s8, 1
      %p72 = por %p70, %p71
      %p73 = scmp.ne.s32.totalorder %s65, %s68
      %p74 = scmp.eq.s32.totalorder %s8, 0
      %p75 = por %p73, %p74
      %p76 = scmp.ne.s32.totalorder %s65, %s68
      %p77 = scmp.eq.s32.totalorder %s13, 1
      %p78 = por %p76, %p77
      %p79 = scmp.ne.s32.totalorder %s68, %s69
      %p80 = scmp.eq.s32.totalorder %s13, 0
      %p81 = por %p79, %p80
      %p82 = scmp.ne.s32.totalorder %s68, %s69
      %p83 = scmp.eq.s32.totalorder %s14, 1
      %p84 = por %p82, %p83
      %p86 = scmp.ne.s32.totalorder %s69, %s85
      %p87 = scmp.eq.s32.totalorder %s14, 0
      %p88 = por %p86, %p87
      %p89 = scmp.le.s32.totalorder 1, %s8
      %p90 = scmp.lt.s32.totalorder %s8, 3
      %p91 = pnand %p89, %p90
      %p92 = pneg %p91
      // Predicated region
      $region9: #{draw_action_forward_batch.1} parent=5 // pred_check
        _
      $region10: #{draw_action_forward_batch.1} parent=5 // pred_check_branch
        %94 = sbr.rel (%p91) target = $region12
      $region11: #{draw_action_forward_batch.1} parent=5 // pred_region
        %s95 = ssub.s32 %s8, 1
        // Predicated region
        $region13: #{draw_action_forward_batch.1} parent=11 // pred_check
          %p96 = pneg %p55
        $region14: #{draw_action_forward_batch.1} parent=11 // pred_check_branch
          %98 = sbr.rel (%p96) target = $region16
        $region15: #{draw_action_forward_batch.1} parent=11 // pred_region
          _
        $region16: #{draw_action_forward_batch.1} parent=11 // pred_fallthru
          _
      $region12: #{draw_action_forward_batch.1} parent=5 // pred_fallthru
        _
      %p99 = scmp.lt.s32.totalorder %s8, 2
      // Predicated region
      $region17: #{draw_action_forward_batch.1} parent=5 // pred_check
        %p100 = pneg %p99
      $region18: #{draw_action_forward_batch.1} parent=5 // pred_check_branch
        %102 = sbr.rel (%p100) target = $region20
      $region19: #{draw_action_forward_batch.1} parent=5 // pred_region
        // Predicated region
        $region21: #{draw_action_forward_batch.1} parent=19 // pred_check
          %p103 = pneg %p28
        $region22: #{draw_action_forward_batch.1} parent=19 // pred_check_branch
          %105 = sbr.rel (%p103) target = $region24
        $region23: #{draw_action_forward_batch.1} parent=19 // pred_region
          %s106 = sand.u32 %s18, 1
          %s107 = sand.u32 %s18, 1
          %s108 = smul.addr %s107, 56
          %s109 = scalar_lea.vmem [#allocation2], %s108
          %s110 = smul.u32 4, %s8
          %s111 = smul.addr %s110, 2
          %s112 = scalar_lea.vmem %s0, %s111
          // Predicated region
          $region25: #{draw_action_forward_batch.1} parent=23 // pred_check
            _
          $region26: #{draw_action_forward_batch.1} parent=23 // pred_check_branch
            %114 = sbr.rel (0) target = $region28
          $region27: #{draw_action_forward_batch.1} parent=23 // pred_region
            // Predicated region
            $region29: #{draw_action_forward_batch.1} parent=27 // pred_check
              _
            $region30: #{draw_action_forward_batch.1} parent=27 // pred_check_branch
              %116 = sbr.rel (0) target = $region32
            $region31: #{draw_action_forward_batch.1} parent=27 // pred_region
              // Predicated region
              $region44: #{draw_action_forward_batch.1} parent=31 // pred_check
                _
              $region45: #{draw_action_forward_batch.1} parent=31 // pred_check_branch
                %143 = sbr.rel (0) target = $region47
              $region46: #{draw_action_forward_batch.1} parent=31 // pred_region
                loop: start=0, step=1, limit=1
                $region48: #{draw_action_forward_batch.1} parent=46 // loop_pre_header
                  _
                $region49: #{draw_action_forward_batch.1} parent=46 // loop_header
                  %s145 = sphi 0, %s149
                  %p146 = scmp.ge.s32.totalorder %s145, 1
                  %s150 = sphi %s112, %s112
                  %s151 = sphi %s109, %s109
                $region50: #{draw_action_forward_batch.1} parent=46 // loop_header_branch
                  %148 = sbr.rel (%p146) target = $region54
                $region51: #{draw_action_forward_batch.1} parent=46 // loop_body
                  %v152 = vld [vmem:[%s150] sm:$0xff]
                  %153 = vst [vmem:[%s151] sm:$0xff] %v152
                  %v154 = vld [vmem:[%s150 + $0x10] sm:$0xff]
                  %155 = vst [vmem:[%s151 + $0x8] sm:$0xff] %v154
                  %v156 = vld [vmem:[%s150 + $0x20] sm:$0xff]
                  %157 = vst [vmem:[%s151 + $0x10] sm:$0xff] %v156
                  %v158 = vld [vmem:[%s150 + $0x30] sm:$0xff]
                  %159 = vst [vmem:[%s151 + $0x18] sm:$0xff] %v158
                  %v160 = vld [vmem:[%s150 + $0x40] sm:$0xff]
                  %161 = vst [vmem:[%s151 + $0x20] sm:$0xff] %v160
                  %v162 = vld [vmem:[%s150 + $0x50] sm:$0xff]
                  %163 = vst [vmem:[%s151 + $0x28] sm:$0xff] %v162
                  %v164 = vld [vmem:[%s150 + $0x60] sm:$0xff]
                  %165 = vst [vmem:[%s151 + $0x30] sm:$0xff] %v164
                $region52: #{draw_action_forward_batch.1} parent=46 // loop_footer
                  %s149 = sadd.s32 1, %s145
                $region53: #{draw_action_forward_batch.1} parent=46 // loop_footer_branch
                  %144 = sbr.rel target = $region49
                $region54: #{draw_action_forward_batch.1} parent=46 // loop_exit
                  _
              $region47: #{draw_action_forward_batch.1} parent=31 // pred_fallthru
                _
              // Predicated region
              $region55: #{draw_action_forward_batch.1} parent=31 // pred_check
                _
              $region56: #{draw_action_forward_batch.1} parent=31 // pred_check_branch
                %167 = sbr.rel target = $region58
              $region57: #{draw_action_forward_batch.1} parent=31 // pred_region
                _
              $region58: #{draw_action_forward_batch.1} parent=31 // pred_fallthru
                _
            $region32: #{draw_action_forward_batch.1} parent=27 // pred_fallthru
              _
            // Predicated region
            $region33: #{draw_action_forward_batch.1} parent=27 // pred_check
              _
            $region34: #{draw_action_forward_batch.1} parent=27 // pred_check_branch
              %118 = sbr.rel target = $region36
            $region35: #{draw_action_forward_batch.1} parent=27 // pred_region
              loop: start=0, step=1, limit=1
              $region37: #{draw_action_forward_batch.1} parent=35 // loop_pre_header
                _
              $region38: #{draw_action_forward_batch.1} parent=35 // loop_header
                %s121 = sphi 0, %s125
                %p122 = scmp.ge.s32.totalorder %s121, 1
                %s126 = sphi %s112, %s112
                %s127 = sphi %s109, %s109
              $region39: #{draw_action_forward_batch.1} parent=35 // loop_header_branch
                %124 = sbr.rel (%p122) target = $region43
              $region40: #{draw_action_forward_batch.1} parent=35 // loop_body
                %v128 = vld [vmem:[%s126] sm:$0xff]
                %129 = vst [vmem:[%s127] sm:$0xff] %v128
                %v130 = vld [vmem:[%s126 + $0x10] sm:$0xff]
                %131 = vst [vmem:[%s127 + $0x8] sm:$0xff] %v130
                %v132 = vld [vmem:[%s126 + $0x20] sm:$0xff]
                %133 = vst [vmem:[%s127 + $0x10] sm:$0xff] %v132
                %v134 = vld [vmem:[%s126 + $0x30] sm:$0xff]
                %135 = vst [vmem:[%s127 + $0x18] sm:$0xff] %v134
                %v136 = vld [vmem:[%s126 + $0x40] sm:$0xff]
                %137 = vst [vmem:[%s127 + $0x20] sm:$0xff] %v136
                %v138 = vld [vmem:[%s126 + $0x50] sm:$0xff]
                %139 = vst [vmem:[%s127 + $0x28] sm:$0xff] %v138
                %v140 = vld [vmem:[%s126 + $0x60] sm:$0xff]
                %141 = vst [vmem:[%s127 + $0x30] sm:$0xff] %v140
              $region41: #{draw_action_forward_batch.1} parent=35 // loop_footer
                %s125 = sadd.s32 1, %s121
              $region42: #{draw_action_forward_batch.1} parent=35 // loop_footer_branch
                %120 = sbr.rel target = $region38
              $region43: #{draw_action_forward_batch.1} parent=35 // loop_exit
                _
            $region36: #{draw_action_forward_batch.1} parent=27 // pred_fallthru
              _
          $region28: #{draw_action_forward_batch.1} parent=23 // pred_fallthru
            _
          %168 = vnop
        $region24: #{draw_action_forward_batch.1} parent=19 // pred_fallthru
          _
      $region20: #{draw_action_forward_batch.1} parent=5 // pred_fallthru
        _
      %p169 = scmp.le.s32.totalorder 1, %s8
      %p170 = scmp.lt.s32.totalorder %s8, 3
      %p171 = pnand %p169, %p170
      %p172 = pneg %p171
      // Predicated region
      $region59: #{draw_action_forward_batch.1} parent=5 // pred_check
        _
      $region60: #{draw_action_forward_batch.1} parent=5 // pred_check_branch
        %174 = sbr.rel (%p171) target = $region62
      $region61: #{draw_action_forward_batch.1} parent=5 // pred_region
        %s175 = ssub.s32 %s8, 1
        %s176 = sand.u32 %s21, 1
        %s177 = sand.u32 %s21, 1
        %s178 = smul.addr %s177, 56
        %s179 = scalar_lea.vmem [#allocation2], %s178
        // Predicated region
        $region63: #{draw_action_forward_batch.1} parent=61 // pred_check
          %p180 = pneg %p34
        $region64: #{draw_action_forward_batch.1} parent=61 // pred_check_branch
          %182 = sbr.rel (%p180) target = $region66
        $region65: #{draw_action_forward_batch.1} parent=61 // pred_region
          _
        $region66: #{draw_action_forward_batch.1} parent=61 // pred_fallthru
          _
        %s183 = sand.u32 %s21, 1
        %s184 = sand.u32 %s21, 1
        %s185 = smul.addr %s184, 56
        %s186 = scalar_lea.vmem [#allocation2], %s185
        %p187 = pneg %p34
        %p188 = pneg %p31
        %p189 = pneg %p55
        %p190 = pneg %p52
        %p191 = pneg %p81
        %p192 = pneg %p78
        %s193 = smul.u32 4, %s13
        %p194 = scmp.lt.s32.totalorder %s193, 7
        %s195 = scalar_select %p194, %s193, 7
        %s196 = scalar_lea.vmem %s2, %s195
        %s197 = smul.u32 4, %s13
        %s198 = smul.u32 4, %s13
        %p199 = scmp.lt.s32.totalorder %s198, 7
        %s200 = scalar_select %p199, %s198, 7
        %s201 = scalar_lea.vmem %s2, %s200
        %s202 = smul.u32 4, %s13
        %v203 = vld [vmem:[%s179] sm:$0xff]
        %v204 = vld [vmem:[%s179 + $0x8] sm:$0xff]
        %v205 = vld [vmem:[%s179 + $0x10] sm:$0xff]
        %v206 = vld [vmem:[%s179 + $0x18] sm:$0xff]
        %v207 = vld [vmem:[%s179 + $0x20] sm:$0xff]
        %v208 = vld [vmem:[%s179 + $0x28] sm:$0xff]
        %v209 = vld [vmem:[%s179 + $0x30] sm:$0xff]
        %v210 = vunpack.c.0.s8 %v203
        %v211 = vunpack.c.1.s8 %v203
        %v212 = vunpack.c.2.s8 %v203
        %v213 = vunpack.c.3.s8 %v203
        %v214 = vunpack.c.0.s8 %v204
        %v215 = vunpack.c.1.s8 %v204
        %v216 = vunpack.c.2.s8 %v204
        %v217 = vunpack.c.3.s8 %v204
        %v218 = vunpack.c.0.s8 %v205
        %v219 = vunpack.c.1.s8 %v205
        %v220 = vunpack.c.2.s8 %v205
        %v221 = vunpack.c.3.s8 %v205
        %v222 = vunpack.c.0.s8 %v206
        %v223 = vunpack.c.1.s8 %v206
        %v224 = vunpack.c.2.s8 %v206
        %v225 = vunpack.c.3.s8 %v206
        %v226 = vunpack.c.0.s8 %v207
        %v227 = vunpack.c.1.s8 %v207
        %v228 = vunpack.c.2.s8 %v207
        %v229 = vunpack.c.3.s8 %v207
        %v230 = vunpack.c.0.s8 %v208
        %v231 = vunpack.c.1.s8 %v208
        %v232 = vunpack.c.2.s8 %v208
        %v233 = vunpack.c.3.s8 %v208
        %v234 = vunpack.c.0.s8 %v209
        %v235 = vunpack.c.1.s8 %v209
        %v236 = vunpack.c.2.s8 %v209
        %v237 = vunpack.c.3.s8 %v209
        %v238 = vcvt.s32.f32 %v210
        %v239 = vcvt.s32.f32 %v211
        %v240 = vcvt.s32.f32 %v212
        %v241 = vcvt.s32.f32 %v213
        %v242 = vcvt.s32.f32 %v214
        %v243 = vcvt.s32.f32 %v215
        %v244 = vcvt.s32.f32 %v216
        %v245 = vcvt.s32.f32 %v217
        %v246 = vcvt.s32.f32 %v218
        %v247 = vcvt.s32.f32 %v219
        %v248 = vcvt.s32.f32 %v220
        %v249 = vcvt.s32.f32 %v221
        %v250 = vcvt.s32.f32 %v222
        %v251 = vcvt.s32.f32 %v223
        %v252 = vcvt.s32.f32 %v224
        %v253 = vcvt.s32.f32 %v225
        %v254 = vcvt.s32.f32 %v226
        %v255 = vcvt.s32.f32 %v227
        %v256 = vcvt.s32.f32 %v228
        %v257 = vcvt.s32.f32 %v229
        %v258 = vcvt.s32.f32 %v230
        %v259 = vcvt.s32.f32 %v231
        %v260 = vcvt.s32.f32 %v232
        %v261 = vcvt.s32.f32 %v233
        %v262 = vcvt.s32.f32 %v234
        %v263 = vcvt.s32.f32 %v235
        %v264 = vcvt.s32.f32 %v236
        %v265 = vcvt.s32.f32 %v237
        %v266 = vld [vmem:[%s1] sm:$0xff]
        %v267 = vld [vmem:[%s1 + $0x8] sm:$0xff]
        %v268 = vld [vmem:[%s1 + $0x80] sm:$0xff]
        %v269 = vld [vmem:[%s1 + $0x88] sm:$0xff]
        %v270 = vld [vmem:[%s1 + $0x90] sm:$0xff]
        %v271 = vld [vmem:[%s1 + $0x98] sm:$0xff]
        %v272 = vld [vmem:[%s1 + $0xa0] sm:$0xff]
        %v273 = vld [vmem:[%s1 + $0xa8] sm:$0xff]
        %v274 = vld [vmem:[%s1 + $0xb0] sm:$0xff]
        %v275 = vld [vmem:[%s1 + $0xb8] sm:$0xff]
        %v276 = vld [vmem:[%s1 + $0xc0] sm:$0xff]
        %v277 = vld [vmem:[%s1 + $0xc8] sm:$0xff]
        %v278 = vld [vmem:[%s1 + $0xd0] sm:$0xff]
        %v279 = vld [vmem:[%s1 + $0xd8] sm:$0xff]
        %v280 = vld [vmem:[%s1 + $0xd0] sm:$0x1]
        %282 = vset.pattern.permute.xlu0 56
        %283 = vperm.xlu0 %282, %v266
        %v284 = vpop.permute.xlu0 %283
        %287 = vset.pattern.permute.xlu0 56
        %288 = vperm.xlu0 %287, %v267
        %v289 = vpop.permute.xlu0 %288
        %vm291 = vcmask 433152
        %v292 = vsel %vm291, %v266, 0
        %v294 = vsel %vm291, %v267, 0
        %vm296 = vcmask 1044480
        %v298 = vsel %vm296, %v262, 0
        %v301 = vsel %vm296, %v263, 0
        %v304 = vsel %vm296, %v264, 0
        %v307 = vsel %vm296, %v265, 0
        %309 = vmatprep.subr.mxu0 %v239
        %310 = vmatpush1.msra.mxu0 %v238
        %311 = vmatprep.subr.mxu0 %v243
        %312 = vmatpush1.msra.mxu0 %v242
        %313 = vmatprep.subr.mxu0 %v247
        %314 = vmatpush1.msra.mxu0 %v246
        %315 = vmatprep.subr.mxu0 %v251
        %316 = vmatpush1.msra.mxu0 %v250
        %317 = vmatprep.subr.mxu0 %v255
        %318 = vmatpush1.msra.mxu0 %v254
        %319 = vmatprep.subr.mxu0 %v259
        %320 = vmatpush1.msra.mxu0 %v258
        %321 = vmatprep.subr.mxu0 %v301
        %322 = vmatpush1.msra.mxu0 %v298
        %323 = vmatprep.subr.mxu0 0.0
        %324 = vmatpush1.msra.mxu0 0.0
        %325 = vmatprep.subr.mxu0 0.0
        %326 = vmatpush1.msra.mxu0 0.0
        %327 = vmatprep.subr.mxu0 0.0
        %328 = vmatpush1.msra.mxu0 0.0
        %329 = vmatprep.subr.mxu0 0.0
        %330 = vmatpush1.msra.mxu0 0.0
        %331 = vmatprep.subr.mxu0 0.0
        %332 = vmatpush1.msra.mxu0 0.0
        %333 = vmatprep.subr.mxu0 0.0
        %334 = vmatpush1.msra.mxu0 0.0
        %335 = vmatprep.subr.mxu0 0.0
        %336 = vmatpush1.msra.mxu0 0.0
        %337 = vmatprep.subr.mxu0 0.0
        %338 = vmatpush1.msra.mxu0 0.0
        %339 = vmatprep.subr.mxu0 0.0
        %340 = vmatpush1.msra.mxu0 0.0
        %341 = vmatprep.subr.mxu0 0.0
        %342 = vmatpush1.msra.mxu0 0.0
        %343 = vmatprep.subr.mxu0 0.0
        %344 = vmatpush1.msra.mxu0 0.0
        %345 = vmatprep.subr.mxu0 0.0
        %346 = vmatpush1.msra.mxu0 0.0
        %347 = vmatprep.subr.mxu0 0.0
        %348 = vmatpush1.msra.mxu0 0.0
        %349 = vmatprep.subr.mxu0 0.0
        %350 = vmatpush1.msra.mxu0 0.0
        %351 = vmatprep.subr.mxu0 0.0
        %352 = vmatpush1.msra.mxu0 0.0
        %353 = vmatprep.subr.mxu0 0.0
        %354 = vmatpush1.msra.mxu0 0.0
        %355 = vmatprep.subr.mxu0 0.0
        %356 = vmatpush1.msra.mxu0 0.0
        %357 = vmatprep.subr.mxu0 0.0
        %358 = vmatpush1.msra.mxu0 0.0
        %359 = vmatprep.subr.mxu0 0.0
        %360 = vmatpush1.msra.mxu0 0.0
        %361 = vmatprep.subr.mxu0 0.0
        %362 = vmatpush1.msra.mxu0 0.0
        %363 = vmatprep.subr.mxu0 0.0
        %364 = vmatpush1.msra.mxu0 0.0
        %365 = vmatprep.subr.mxu0 0.0
        %366 = vmatpush1.msra.mxu0 0.0
        %367 = vmatprep.subr.mxu0 0.0
        %368 = vmatpush1.msra.mxu0 0.0
        %369 = vmatprep.subr.mxu0 0.0
        %370 = vmatpush1.msra.mxu0 0.0
        %371 = vmatprep.subr.mxu0 0.0
        %372 = vmatpush1.msra.mxu0 0.0
        %373 = vmatprep.mubr.f32.mxu0 0.0
        %374 = vmatmul.mubr.f32.gmra.mrb[0].mxu0 %v292
        %v375 = vpop.f32.mrb[0].mxu0
        %v376 = vadd.f32 %v284, %v375
        %v377 = vpop.f32.mrb[0].mxu0
        %v378 = vadd.f32 %v284, %v377
        %379 = vmatprep.mubr.f32.mxu0 0.0
        %380 = vmatmul.mubr.f32.gmra.mrb[0].mxu0 %v294
        %v381 = vpop.f32.mrb[0].mxu0
        %v382 = vadd.f32 %v289, %v381
        %v383 = vpop.f32.mrb[0].mxu0
        %v384 = vadd.f32 %v289, %v383
        %385 = vdwg.mxu0
        %386 = vmatprep.subr.mxu0 %v241
        %387 = vmatpush1.msra.mxu0 %v240
        %388 = vmatprep.subr.mxu0 %v245
        %389 = vmatpush1.msra.mxu0 %v244
        %390 = vmatprep.subr.mxu0 %v249
        %391 = vmatpush1.msra.mxu0 %v248
        %392 = vmatprep.subr.mxu0 %v253
        %393 = vmatpush1.msra.mxu0 %v252
        %394 = vmatprep.subr.mxu0 %v257
        %395 = vmatpush1.msra.mxu0 %v256
        %396 = vmatprep.subr.mxu0 %v261
        %397 = vmatpush1.msra.mxu0 %v260
        %398 = vmatprep.subr.mxu0 %v307
        %399 = vmatpush1.msra.mxu0 %v304
        %400 = vmatprep.subr.mxu0 0.0
        %401 = vmatpush1.msra.mxu0 0.0
        %402 = vmatprep.subr.mxu0 0.0
        %403 = vmatpush1.msra.mxu0 0.0
        %404 = vmatprep.subr.mxu0 0.0
        %405 = vmatpush1.msra.mxu0 0.0
        %406 = vmatprep.subr.mxu0 0.0
        %407 = vmatpush1.msra.mxu0 0.0
        %408 = vmatprep.subr.mxu0 0.0
        %409 = vmatpush1.msra.mxu0 0.0
        %410 = vmatprep.subr.mxu0 0.0
        %411 = vmatpush1.msra.mxu0 0.0
        %412 = vmatprep.subr.mxu0 0.0
        %413 = vmatpush1.msra.mxu0 0.0
        %414 = vmatprep.subr.mxu0 0.0
        %415 = vmatpush1.msra.mxu0 0.0
        %416 = vmatprep.subr.mxu0 0.0
        %417 = vmatpush1.msra.mxu0 0.0
        %418 = vmatprep.subr.mxu0 0.0
        %419 = vmatpush1.msra.mxu0 0.0
        %420 = vmatprep.subr.mxu0 0.0
        %421 = vmatpush1.msra.mxu0 0.0
        %422 = vmatprep.subr.mxu0 0.0
        %423 = vmatpush1.msra.mxu0 0.0
        %424 = vmatprep.subr.mxu0 0.0
        %425 = vmatpush1.msra.mxu0 0.0
        %426 = vmatprep.subr.mxu0 0.0
        %427 = vmatpush1.msra.mxu0 0.0
        %428 = vmatprep.subr.mxu0 0.0
        %429 = vmatpush1.msra.mxu0 0.0
        %430 = vmatprep.subr.mxu0 0.0
        %431 = vmatpush1.msra.mxu0 0.0
        %432 = vmatprep.subr.mxu0 0.0
        %433 = vmatpush1.msra.mxu0 0.0
        %434 = vmatprep.subr.mxu0 0.0
        %435 = vmatpush1.msra.mxu0 0.0
        %436 = vmatprep.subr.mxu0 0.0
        %437 = vmatpush1.msra.mxu0 0.0
        %438 = vmatprep.subr.mxu0 0.0
        %439 = vmatpush1.msra.mxu0 0.0
        %440 = vmatprep.subr.mxu0 0.0
        %441 = vmatpush1.msra.mxu0 0.0
        %442 = vmatprep.subr.mxu0 0.0
        %443 = vmatpush1.msra.mxu0 0.0
        %444 = vmatprep.subr.mxu0 0.0
        %445 = vmatpush1.msra.mxu0 0.0
        %446 = vmatprep.subr.mxu0 0.0
        %447 = vmatpush1.msra.mxu0 0.0
        %448 = vmatprep.subr.mxu0 0.0
        %449 = vmatpush1.msra.mxu0 0.0
        %450 = vmatprep.mubr.f32.mxu0 0.0
        %451 = vmatmul.mubr.f32.gmra.mrb[0].mxu0 %v292
        %v452 = vpop.f32.mrb[0].mxu0
        %v453 = vadd.f32 %v284, %v452
        %v454 = vpop.f32.mrb[0].mxu0
        %v455 = vadd.f32 %v284, %v454
        %456 = vmatprep.mubr.f32.mxu0 0.0
        %457 = vmatmul.mubr.f32.gmra.mrb[0].mxu0 %v294
        %v458 = vpop.f32.mrb[0].mxu0
        %v459 = vadd.f32 %v289, %v458
        %v460 = vpop.f32.mrb[0].mxu0
        %v461 = vadd.f32 %v289, %v460
        %462 = vdwg.mxu0
        %v463 = vlaneseq
        %v464 = vshrl.u32 %v463, 7
        %v465 = vadd.s32 %v464, 8
        %vm466 = vcmp.lt.s32.totalorder %v464, 13
        %vm467 = vcmp.lt.s32.totalorder %v465, 13
        %v468 = vsel %vm466, %v376, -1e+30
        %v469 = vsel %vm466, %v378, -1e+30
        %v470 = vsel %vm466, %v453, -1e+30
        %v471 = vsel %vm466, %v455, -1e+30
        %v472 = vsel %vm467, %v382, -1e+30
        %v473 = vsel %vm467, %v384, -1e+30
        %v474 = vsel %vm467, %v459, -1e+30
        %v475 = vsel %vm467, %v461, -1e+30
        %v476 = vmax.f32 %v468, %v472
        %v477 = vrot.slane %v476, 4
        %v478 = vmax.f32 %v476, %v477
        %v479 = vrot.slane %v478, 2
        %v480 = vmax.f32 %v478, %v479
        %v481 = vrot.slane %v480, 1
        %v482 = vmax.f32 %v480, %v481
        %v483 = vmax.f32 %v469, %v473
        %v484 = vrot.slane %v483, 4
        %v485 = vmax.f32 %v483, %v484
        %v486 = vrot.slane %v485, 2
        %v487 = vmax.f32 %v485, %v486
        %v488 = vrot.slane %v487, 1
        %v489 = vmax.f32 %v487, %v488
        %v490 = vmax.f32 %v470, %v474
        %v491 = vrot.slane %v490, 4
        %v492 = vmax.f32 %v490, %v491
        %v493 = vrot.slane %v492, 2
        %v494 = vmax.f32 %v492, %v493
        %v495 = vrot.slane %v494, 1
        %v496 = vmax.f32 %v494, %v495
        %v497 = vmax.f32 %v471, %v475
        %v498 = vrot.slane %v497, 4
        %v499 = vmax.f32 %v497, %v498
        %v500 = vrot.slane %v499, 2
        %v501 = vmax.f32 %v499, %v500
        %v502 = vrot.slane %v501, 1
        %v503 = vmax.f32 %v501, %v502
        %v504 = vsub.f32 %v468, %v482
        %v505 = vsub.f32 %v469, %v489
        %v506 = vsub.f32 %v470, %v496
        %v507 = vsub.f32 %v471, %v503
        %v508 = vsub.f32 %v472, %v482
        %v509 = vsub.f32 %v473, %v489
        %v510 = vsub.f32 %v474, %v496
        %v511 = vsub.f32 %v475, %v503
        %v512 = vmul.f32 %v504, 1.442695
        %v513 = vpow.pop %v512
        %v514 = vmul.f32 %v505, 1.442695
        %v515 = vpow.pop %v514
        %v516 = vmul.f32 %v506, 1.442695
        %v517 = vpow.pop %v516
        %v518 = vmul.f32 %v507, 1.442695
        %v519 = vpow.pop %v518
        %v520 = vmul.f32 %v508, 1.442695
        %v521 = vpow.pop %v520
        %v522 = vmul.f32 %v509, 1.442695
        %v523 = vpow.pop %v522
        %v524 = vmul.f32 %v510, 1.442695
        %v525 = vpow.pop %v524
        %v526 = vmul.f32 %v511, 1.442695
        %v527 = vpow.pop %v526
        %v528 = vadd.f32 %v513, %v521
        %v529 = vrot.slane %v528, 4
        %v530 = vadd.f32 %v528, %v529
        %v531 = vrot.slane %v530, 2
        %v532 = vadd.f32 %v530, %v531
        %v533 = vrot.slane %v532, 1
        %v534 = vadd.f32 %v532, %v533
        %v535 = vadd.f32 %v515, %v523
        %v536 = vrot.slane %v535, 4
        %v537 = vadd.f32 %v535, %v536
        %v538 = vrot.slane %v537, 2
        %v539 = vadd.f32 %v537, %v538
        %v540 = vrot.slane %v539, 1
        %v541 = vadd.f32 %v539, %v540
        %v542 = vadd.f32 %v517, %v525
        %v543 = vrot.slane %v542, 4
        %v544 = vadd.f32 %v542, %v543
        %v545 = vrot.slane %v544, 2
        %v546 = vadd.f32 %v544, %v545
        %v547 = vrot.slane %v546, 1
        %v548 = vadd.f32 %v546, %v547
        %v549 = vadd.f32 %v519, %v527
        %v550 = vrot.slane %v549, 4
        %v551 = vadd.f32 %v549, %v550
        %v552 = vrot.slane %v551, 2
        %v553 = vadd.f32 %v551, %v552
        %v554 = vrot.slane %v553, 1
        %v555 = vadd.f32 %v553, %v554
        %v556 = vrcp.pop %v534
        %v557 = vrcp.pop %v541
        %v558 = vrcp.pop %v548
        %v559 = vrcp.pop %v555
        %v560 = vmul.f32 %v513, %v556
        %v561 = vmul.f32 %v515, %v557
        %v562 = vmul.f32 %v517, %v558
        %v563 = vmul.f32 %v519, %v559
        %v564 = vmul.f32 %v521, %v556
        %v565 = vmul.f32 %v523, %v557
        %v566 = vmul.f32 %v525, %v558
        %v567 = vmul.f32 %v527, %v559
        %v568 = vadd.s32 %v464, 16
        %v569 = vadd.s32 %v464, 24
        %v570 = vadd.s32 %v464, 32
        %v571 = vadd.s32 %v464, 40
        %v572 = vadd.s32 %v464, 48
        %v573 = vadd.s32 %v464, 56
        %v574 = vadd.s32 %v464, 64
        %v575 = vadd.s32 %v464, 72
        %v576 = vadd.s32 %v464, 80
        %v577 = vadd.s32 %v464, 88
        %v578 = vadd.s32 %v464, 96
        %v579 = vadd.s32 %v464, 104
        %v580 = vadd.s32 %v464, 112
        %v581 = vadd.s32 %v464, 120
        %v582 = vcvt.f32.s32.to.zero.pseudo %v238
        %v583 = vcvt.f32.s32.to.zero.pseudo %v239
        %v584 = vcvt.f32.s32.to.zero.pseudo %v240
        %v585 = vcvt.f32.s32.to.zero.pseudo %v241
        %v586 = vadd.s32 %v582, 13
        %v587 = vadd.s32 %v583, 13
        %v588 = vadd.s32 %v584, 13
        %v589 = vadd.s32 %v585, 13
        %v590 = vlaneseq
        %v591 = vshrl.u32 %v590, 7
        %v592 = vsub.s32 0, %v591
        %v593 = vrot.slane %v586, %v592
        %v594 = vlaneseq
        %v595 = vshrl.u32 %v594, 7
        %v596 = vsub.s32 0, %v595
        %v597 = vrot.slane %v587, %v596
        %v598 = vlaneseq
        %v599 = vshrl.u32 %v598, 7
        %v600 = vsub.s32 0, %v599
        %v601 = vrot.slane %v588, %v600
        %v602 = vlaneseq
        %v603 = vshrl.u32 %v602, 7
        %v604 = vsub.s32 0, %v603
        %v605 = vrot.slane %v589, %v604
        %vm606 = vcmp.eq.s32.totalorder %v464, %v593
        %vm607 = vcmp.eq.s32.totalorder %v464, %v597
        %vm608 = vcmp.eq.s32.totalorder %v464, %v601
        %vm609 = vcmp.eq.s32.totalorder %v464, %v605
        %vm610 = vcmp.eq.s32.totalorder %v465, %v593
        %vm611 = vcmp.eq.s32.totalorder %v465, %v597
        %vm612 = vcmp.eq.s32.totalorder %v465, %v601
        %vm613 = vcmp.eq.s32.totalorder %v465, %v605
        %vm614 = vcmp.eq.s32.totalorder %v568, %v593
        %vm615 = vcmp.eq.s32.totalorder %v568, %v597
        %vm616 = vcmp.eq.s32.totalorder %v568, %v601
        %vm617 = vcmp.eq.s32.totalorder %v568, %v605
        %vm618 = vcmp.eq.s32.totalorder %v569, %v593
        %vm619 = vcmp.eq.s32.totalorder %v569, %v597
        %vm620 = vcmp.eq.s32.totalorder %v569, %v601
        %vm621 = vcmp.eq.s32.totalorder %v569, %v605
        %vm622 = vcmp.eq.s32.totalorder %v570, %v593
        %vm623 = vcmp.eq.s32.totalorder %v570, %v597
        %vm624 = vcmp.eq.s32.totalorder %v570, %v601
        %vm625 = vcmp.eq.s32.totalorder %v570, %v605
        %vm626 = vcmp.eq.s32.totalorder %v571, %v593
        %vm627 = vcmp.eq.s32.totalorder %v571, %v597
        %vm628 = vcmp.eq.s32.totalorder %v571, %v601
        %vm629 = vcmp.eq.s32.totalorder %v571, %v605
        %vm630 = vcmp.eq.s32.totalorder %v572, %v593
        %vm631 = vcmp.eq.s32.totalorder %v572, %v597
        %vm632 = vcmp.eq.s32.totalorder %v572, %v601
        %vm633 = vcmp.eq.s32.totalorder %v572, %v605
        %vm634 = vcmp.eq.s32.totalorder %v573, %v593
        %vm635 = vcmp.eq.s32.totalorder %v573, %v597
        %vm636 = vcmp.eq.s32.totalorder %v573, %v601
        %vm637 = vcmp.eq.s32.totalorder %v573, %v605
        %vm638 = vcmp.eq.s32.totalorder %v574, %v593
        %vm639 = vcmp.eq.s32.totalorder %v574, %v597
        %vm640 = vcmp.eq.s32.totalorder %v574, %v601
        %vm641 = vcmp.eq.s32.totalorder %v574, %v605
        %vm642 = vcmp.eq.s32.totalorder %v575, %v593
        %vm643 = vcmp.eq.s32.totalorder %v575, %v597
        %vm644 = vcmp.eq.s32.totalorder %v575, %v601
        %vm645 = vcmp.eq.s32.totalorder %v575, %v605
        %vm646 = vcmp.eq.s32.totalorder %v576, %v593
        %vm647 = vcmp.eq.s32.totalorder %v576, %v597
        %vm648 = vcmp.eq.s32.totalorder %v576, %v601
        %vm649 = vcmp.eq.s32.totalorder %v576, %v605
        %vm650 = vcmp.eq.s32.totalorder %v577, %v593
        %vm651 = vcmp.eq.s32.totalorder %v577, %v597
        %vm652 = vcmp.eq.s32.totalorder %v577, %v601
        %vm653 = vcmp.eq.s32.totalorder %v577, %v605
        %vm654 = vcmp.eq.s32.totalorder %v578, %v593
        %vm655 = vcmp.eq.s32.totalorder %v578, %v597
        %vm656 = vcmp.eq.s32.totalorder %v578, %v601
        %vm657 = vcmp.eq.s32.totalorder %v578, %v605
        %vm658 = vcmp.eq.s32.totalorder %v579, %v593
        %vm659 = vcmp.eq.s32.totalorder %v579, %v597
        %vm660 = vcmp.eq.s32.totalorder %v579, %v601
        %vm661 = vcmp.eq.s32.totalorder %v579, %v605
        %vm662 = vcmp.eq.s32.totalorder %v580, %v593
        %vm663 = vcmp.eq.s32.totalorder %v580, %v597
        %vm664 = vcmp.eq.s32.totalorder %v580, %v601
        %vm665 = vcmp.eq.s32.totalorder %v580, %v605
        %vm666 = vcmp.eq.s32.totalorder %v581, %v593
        %vm667 = vcmp.eq.s32.totalorder %v581, %v597
        %vm668 = vcmp.eq.s32.totalorder %v581, %v601
        %vm669 = vcmp.eq.s32.totalorder %v581, %v605
        %v670 = vadd.s32 %v582, 26
        %v671 = vadd.s32 %v583, 26
        %v672 = vadd.s32 %v584, 26
        %v673 = vadd.s32 %v585, 26
        %v674 = vlaneseq
        %v675 = vshrl.u32 %v674, 7
        %v676 = vsub.s32 1, %v675
        %v677 = vrot.slane %v670, %v676
        %v678 = vlaneseq
        %v679 = vshrl.u32 %v678, 7
        %v680 = vsub.s32 1, %v679
        %v681 = vrot.slane %v671, %v680
        %v682 = vlaneseq
        %v683 = vshrl.u32 %v682, 7
        %v684 = vsub.s32 1, %v683
        %v685 = vrot.slane %v672, %v684
        %v686 = vlaneseq
        %v687 = vshrl.u32 %v686, 7
        %v688 = vsub.s32 1, %v687
        %v689 = vrot.slane %v673, %v688
        %vm690 = vcmp.eq.s32.totalorder %v464, %v677
        %vm691 = vcmp.eq.s32.totalorder %v464, %v681
        %vm692 = vcmp.eq.s32.totalorder %v464, %v685
        %vm693 = vcmp.eq.s32.totalorder %v464, %v689
        %vm694 = vcmp.eq.s32.totalorder %v465, %v677
        %vm695 = vcmp.eq.s32.totalorder %v465, %v681
        %vm696 = vcmp.eq.s32.totalorder %v465, %v685
        %vm697 = vcmp.eq.s32.totalorder %v465, %v689
        %vm698 = vcmp.eq.s32.totalorder %v568, %v677
        %vm699 = vcmp.eq.s32.totalorder %v568, %v681
        %vm700 = vcmp.eq.s32.totalorder %v568, %v685
        %vm701 = vcmp.eq.s32.totalorder %v568, %v689
        %vm702 = vcmp.eq.s32.totalorder %v569, %v677
        %vm703 = vcmp.eq.s32.totalorder %v569, %v681
        %vm704 = vcmp.eq.s32.totalorder %v569, %v685
        %vm705 = vcmp.eq.s32.totalorder %v569, %v689
        %vm706 = vcmp.eq.s32.totalorder %v570, %v677
        %vm707 = vcmp.eq.s32.totalorder %v570, %v681
        %vm708 = vcmp.eq.s32.totalorder %v570, %v685
        %vm709 = vcmp.eq.s32.totalorder %v570, %v689
        %vm710 = vcmp.eq.s32.totalorder %v571, %v677
        %vm711 = vcmp.eq.s32.totalorder %v571, %v681
        %vm712 = vcmp.eq.s32.totalorder %v571, %v685
        %vm713 = vcmp.eq.s32.totalorder %v571, %v689
        %vm714 = vcmp.eq.s32.totalorder %v572, %v677
        %vm715 = vcmp.eq.s32.totalorder %v572, %v681
        %vm716 = vcmp.eq.s32.totalorder %v572, %v685
        %vm717 = vcmp.eq.s32.totalorder %v572, %v689
        %vm718 = vcmp.eq.s32.totalorder %v573, %v677
        %vm719 = vcmp.eq.s32.totalorder %v573, %v681
        %vm720 = vcmp.eq.s32.totalorder %v573, %v685
        %vm721 = vcmp.eq.s32.totalorder %v573, %v689
        %vm722 = vcmp.eq.s32.totalorder %v574, %v677
        %vm723 = vcmp.eq.s32.totalorder %v574, %v681
        %vm724 = vcmp.eq.s32.totalorder %v574, %v685
        %vm725 = vcmp.eq.s32.totalorder %v574, %v689
        %vm726 = vcmp.eq.s32.totalorder %v575, %v677
        %vm727 = vcmp.eq.s32.totalorder %v575, %v681
        %vm728 = vcmp.eq.s32.totalorder %v575, %v685
        %vm729 = vcmp.eq.s32.totalorder %v575, %v689
        %vm730 = vcmp.eq.s32.totalorder %v576, %v677
        %vm731 = vcmp.eq.s32.totalorder %v576, %v681
        %vm732 = vcmp.eq.s32.totalorder %v576, %v685
        %vm733 = vcmp.eq.s32.totalorder %v576, %v689
        %vm734 = vcmp.eq.s32.totalorder %v577, %v677
        %vm735 = vcmp.eq.s32.totalorder %v577, %v681
        %vm736 = vcmp.eq.s32.totalorder %v577, %v685
        %vm737 = vcmp.eq.s32.totalorder %v577, %v689
        %vm738 = vcmp.eq.s32.totalorder %v578, %v677
        %vm739 = vcmp.eq.s32.totalorder %v578, %v681
        %vm740 = vcmp.eq.s32.totalorder %v578, %v685
        %vm741 = vcmp.eq.s32.totalorder %v578, %v689
        %vm742 = vcmp.eq.s32.totalorder %v579, %v677
        %vm743 = vcmp.eq.s32.totalorder %v579, %v681
        %vm744 = vcmp.eq.s32.totalorder %v579, %v685
        %vm745 = vcmp.eq.s32.totalorder %v579, %v689
        %vm746 = vcmp.eq.s32.totalorder %v580, %v677
        %vm747 = vcmp.eq.s32.totalorder %v580, %v681
        %vm748 = vcmp.eq.s32.totalorder %v580, %v685
        %vm749 = vcmp.eq.s32.totalorder %v580, %v689
        %vm750 = vcmp.eq.s32.totalorder %v581, %v677
        %vm751 = vcmp.eq.s32.totalorder %v581, %v681
        %vm752 = vcmp.eq.s32.totalorder %v581, %v685
        %vm753 = vcmp.eq.s32.totalorder %v581, %v689
        %vm754 = vmor %vm606, %vm690
        %vm755 = vmor %vm607, %vm691
        %vm756 = vmor %vm608, %vm692
        %vm757 = vmor %vm609, %vm693
        %vm758 = vmor %vm610, %vm694
        %vm759 = vmor %vm611, %vm695
        %vm760 = vmor %vm612, %vm696
        %vm761 = vmor %vm613, %vm697
        %vm762 = vmor %vm614, %vm698
        %vm763 = vmor %vm615, %vm699
        %vm764 = vmor %vm616, %vm700
        %vm765 = vmor %vm617, %vm701
        %vm766 = vmor %vm618, %vm702
        %vm767 = vmor %vm619, %vm703
        %vm768 = vmor %vm620, %vm704
        %vm769 = vmor %vm621, %vm705
        %vm770 = vmor %vm622, %vm706
        %vm771 = vmor %vm623, %vm707
        %vm772 = vmor %vm624, %vm708
        %vm773 = vmor %vm625, %vm709
        %vm774 = vmor %vm626, %vm710
        %vm775 = vmor %vm627, %vm711
        %vm776 = vmor %vm628, %vm712
        %vm777 = vmor %vm629, %vm713
        %vm778 = vmor %vm630, %vm714
        %vm779 = vmor %vm631, %vm715
        %vm780 = vmor %vm632, %vm716
        %vm781 = vmor %vm633, %vm717
        %vm782 = vmor %vm634, %vm718
        %vm783 = vmor %vm635, %vm719
        %vm784 = vmor %vm636, %vm720
        %vm785 = vmor %vm637, %vm721
        %vm786 = vmor %vm638, %vm722
        %vm787 = vmor %vm639, %vm723
        %vm788 = vmor %vm640, %vm724
        %vm789 = vmor %vm641, %vm725
        %vm790 = vmor %vm642, %vm726
        %vm791 = vmor %vm643, %vm727
        %vm792 = vmor %vm644, %vm728
        %vm793 = vmor %vm645, %vm729
        %vm794 = vmor %vm646, %vm730
        %vm795 = vmor %vm647, %vm731
        %vm796 = vmor %vm648, %vm732
        %vm797 = vmor %vm649, %vm733
        %vm798 = vmor %vm650, %vm734
        %vm799 = vmor %vm651, %vm735
        %vm800 = vmor %vm652, %vm736
        %vm801 = vmor %vm653, %vm737
        %vm802 = vmor %vm654, %vm738
        %vm803 = vmor %vm655, %vm739
        %vm804 = vmor %vm656, %vm740
        %vm805 = vmor %vm657, %vm741
        %vm806 = vmor %vm658, %vm742
        %vm807 = vmor %vm659, %vm743
        %vm808 = vmor %vm660, %vm744
        %vm809 = vmor %vm661, %vm745
        %vm810 = vmor %vm662, %vm746
        %vm811 = vmor %vm663, %vm747
        %vm812 = vmor %vm664, %vm748
        %vm813 = vmor %vm665, %vm749
        %vm814 = vmor %vm666, %vm750
        %vm815 = vmor %vm667, %vm751
        %vm816 = vmor %vm668, %vm752
        %vm817 = vmor %vm669, %vm753
        %v818 = vadd.s32 %v582, 39
        %v819 = vadd.s32 %v583, 39
        %v820 = vadd.s32 %v584, 39
        %v821 = vadd.s32 %v585, 39
        %v822 = vlaneseq
        %v823 = vshrl.u32 %v822, 7
        %v824 = vsub.s32 2, %v823
        %v825 = vrot.slane %v818, %v824
        %v826 = vlaneseq
        %v827 = vshrl.u32 %v826, 7
        %v828 = vsub.s32 2, %v827
        %v829 = vrot.slane %v819, %v828
        %v830 = vlaneseq
        %v831 = vshrl.u32 %v830, 7
        %v832 = vsub.s32 2, %v831
        %v833 = vrot.slane %v820, %v832
        %v834 = vlaneseq
        %v835 = vshrl.u32 %v834, 7
        %v836 = vsub.s32 2, %v835
        %v837 = vrot.slane %v821, %v836
        %vm838 = vcmp.eq.s32.totalorder %v464, %v825
        %vm839 = vcmp.eq.s32.totalorder %v464, %v829
        %vm840 = vcmp.eq.s32.totalorder %v464, %v833
        %vm841 = vcmp.eq.s32.totalorder %v464, %v837
        %vm842 = vcmp.eq.s32.totalorder %v465, %v825
        %vm843 = vcmp.eq.s32.totalorder %v465, %v829
        %vm844 = vcmp.eq.s32.totalorder %v465, %v833
        %vm845 = vcmp.eq.s32.totalorder %v465, %v837
        %vm846 = vcmp.eq.s32.totalorder %v568, %v825
        %vm847 = vcmp.eq.s32.totalorder %v568, %v829
        %vm848 = vcmp.eq.s32.totalorder %v568, %v833
        %vm849 = vcmp.eq.s32.totalorder %v568, %v837
        %vm850 = vcmp.eq.s32.totalorder %v569, %v825
        %vm851 = vcmp.eq.s32.totalorder %v569, %v829
        %vm852 = vcmp.eq.s32.totalorder %v569, %v833
        %vm853 = vcmp.eq.s32.totalorder %v569, %v837
        %vm854 = vcmp.eq.s32.totalorder %v570, %v825
        %vm855 = vcmp.eq.s32.totalorder %v570, %v829
        %vm856 = vcmp.eq.s32.totalorder %v570, %v833
        %vm857 = vcmp.eq.s32.totalorder %v570, %v837
        %vm858 = vcmp.eq.s32.totalorder %v571, %v825
        %vm859 = vcmp.eq.s32.totalorder %v571, %v829
        %vm860 = vcmp.eq.s32.totalorder %v571, %v833
        %vm861 = vcmp.eq.s32.totalorder %v571, %v837
        %vm862 = vcmp.eq.s32.totalorder %v572, %v825
        %vm863 = vcmp.eq.s32.totalorder %v572, %v829
        %vm864 = vcmp.eq.s32.totalorder %v572, %v833
        %vm865 = vcmp.eq.s32.totalorder %v572, %v837
        %vm866 = vcmp.eq.s32.totalorder %v573, %v825
        %vm867 = vcmp.eq.s32.totalorder %v573, %v829
        %vm868 = vcmp.eq.s32.totalorder %v573, %v833
        %vm869 = vcmp.eq.s32.totalorder %v573, %v837
        %vm870 = vcmp.eq.s32.totalorder %v574, %v825
        %vm871 = vcmp.eq.s32.totalorder %v574, %v829
        %vm872 = vcmp.eq.s32.totalorder %v574, %v833
        %vm873 = vcmp.eq.s32.totalorder %v574, %v837
        %vm874 = vcmp.eq.s32.totalorder %v575, %v825
        %vm875 = vcmp.eq.s32.totalorder %v575, %v829
        %vm876 = vcmp.eq.s32.totalorder %v575, %v833
        %vm877 = vcmp.eq.s32.totalorder %v575, %v837
        %vm878 = vcmp.eq.s32.totalorder %v576, %v825
        %vm879 = vcmp.eq.s32.totalorder %v576, %v829
        %vm880 = vcmp.eq.s32.totalorder %v576, %v833
        %vm881 = vcmp.eq.s32.totalorder %v576, %v837
        %vm882 = vcmp.eq.s32.totalorder %v577, %v825
        %vm883 = vcmp.eq.s32.totalorder %v577, %v829
        %vm884 = vcmp.eq.s32.totalorder %v577, %v833
        %vm885 = vcmp.eq.s32.totalorder %v577, %v837
        %vm886 = vcmp.eq.s32.totalorder %v578, %v825
        %vm887 = vcmp.eq.s32.totalorder %v578, %v829
        %vm888 = vcmp.eq.s32.totalorder %v578, %v833
        %vm889 = vcmp.eq.s32.totalorder %v578, %v837
        %vm890 = vcmp.eq.s32.totalorder %v579, %v825
        %vm891 = vcmp.eq.s32.totalorder %v579, %v829
        %vm892 = vcmp.eq.s32.totalorder %v579, %v833
        %vm893 = vcmp.eq.s32.totalorder %v579, %v837
        %vm894 = vcmp.eq.s32.totalorder %v580, %v825
        %vm895 = vcmp.eq.s32.totalorder %v580, %v829
        %vm896 = vcmp.eq.s32.totalorder %v580, %v833
        %vm897 = vcmp.eq.s32.totalorder %v580, %v837
        %vm898 = vcmp.eq.s32.totalorder %v581, %v825
        %vm899 = vcmp.eq.s32.totalorder %v581, %v829
        %vm900 = vcmp.eq.s32.totalorder %v581, %v833
        %vm901 = vcmp.eq.s32.totalorder %v581, %v837
        %vm902 = vmor %vm754, %vm838
        %vm903 = vmor %vm755, %vm839
        %vm904 = vmor %vm756, %vm840
        %vm905 = vmor %vm757, %vm841
        %vm906 = vmor %vm758, %vm842
        %vm907 = vmor %vm759, %vm843
        %vm908 = vmor %vm760, %vm844
        %vm909 = vmor %vm761, %vm845
        %vm910 = vmor %vm762, %vm846
        %vm911 = vmor %vm763, %vm847
        %vm912 = vmor %vm764, %vm848
        %vm913 = vmor %vm765, %vm849
        %vm914 = vmor %vm766, %vm850
        %vm915 = vmor %vm767, %vm851
        %vm916 = vmor %vm768, %vm852
        %vm917 = vmor %vm769, %vm853
        %vm918 = vmor %vm770, %vm854
        %vm919 = vmor %vm771, %vm855
        %vm920 = vmor %vm772, %vm856
        %vm921 = vmor %vm773, %vm857
        %vm922 = vmor %vm774, %vm858
        %vm923 = vmor %vm775, %vm859
        %vm924 = vmor %vm776, %vm860
        %vm925 = vmor %vm777, %vm861
        %vm926 = vmor %vm778, %vm862
        %vm927 = vmor %vm779, %vm863
        %vm928 = vmor %vm780, %vm864
        %vm929 = vmor %vm781, %vm865
        %vm930 = vmor %vm782, %vm866
        %vm931 = vmor %vm783, %vm867
        %vm932 = vmor %vm784, %vm868
        %vm933 = vmor %vm785, %vm869
        %vm934 = vmor %vm786, %vm870
        %vm935 = vmor %vm787, %vm871
        %vm936 = vmor %vm788, %vm872
        %vm937 = vmor %vm789, %vm873
        %vm938 = vmor %vm790, %vm874
        %vm939 = vmor %vm791, %vm875
        %vm940 = vmor %vm792, %vm876
        %vm941 = vmor %vm793, %vm877
        %vm942 = vmor %vm794, %vm878
        %vm943 = vmor %vm795, %vm879
        %vm944 = vmor %vm796, %vm880
        %vm945 = vmor %vm797, %vm881
        %vm946 = vmor %vm798, %vm882
        %vm947 = vmor %vm799, %vm883
        %vm948 = vmor %vm800, %vm884
        %vm949 = vmor %vm801, %vm885
        %vm950 = vmor %vm802, %vm886
        %vm951 = vmor %vm803, %vm887
        %vm952 = vmor %vm804, %vm888
        %vm953 = vmor %vm805, %vm889
        %vm954 = vmor %vm806, %vm890
        %vm955 = vmor %vm807, %vm891
        %vm956 = vmor %vm808, %vm892
        %vm957 = vmor %vm809, %vm893
        %vm958 = vmor %vm810, %vm894
        %vm959 = vmor %vm811, %vm895
        %vm960 = vmor %vm812, %vm896
        %vm961 = vmor %vm813, %vm897
        %vm962 = vmor %vm814, %vm898
        %vm963 = vmor %vm815, %vm899
        %vm964 = vmor %vm816, %vm900
        %vm965 = vmor %vm817, %vm901
        %v966 = vadd.s32 %v582, 52
        %v967 = vadd.s32 %v583, 52
        %v968 = vadd.s32 %v584, 52
        %v969 = vadd.s32 %v585, 52
        %v970 = vlaneseq
        %v971 = vshrl.u32 %v970, 7
        %v972 = vsub.s32 3, %v971
        %v973 = vrot.slane %v966, %v972
        %v974 = vlaneseq
        %v975 = vshrl.u32 %v974, 7
        %v976 = vsub.s32 3, %v975
        %v977 = vrot.slane %v967, %v976
        %v978 = vlaneseq
        %v979 = vshrl.u32 %v978, 7
        %v980 = vsub.s32 3, %v979
        %v981 = vrot.slane %v968, %v980
        %v982 = vlaneseq
        %v983 = vshrl.u32 %v982, 7
        %v984 = vsub.s32 3, %v983
        %v985 = vrot.slane %v969, %v984
        %vm986 = vcmp.eq.s32.totalorder %v464, %v973
        %vm987 = vcmp.eq.s32.totalorder %v464, %v977
        %vm988 = vcmp.eq.s32.totalorder %v464, %v981
        %vm989 = vcmp.eq.s32.totalorder %v464, %v985
        %vm990 = vcmp.eq.s32.totalorder %v465, %v973
        %vm991 = vcmp.eq.s32.totalorder %v465, %v977
        %vm992 = vcmp.eq.s32.totalorder %v465, %v981
        %vm993 = vcmp.eq.s32.totalorder %v465, %v985
        %vm994 = vcmp.eq.s32.totalorder %v568, %v973
        %vm995 = vcmp.eq.s32.totalorder %v568, %v977
        %vm996 = vcmp.eq.s32.totalorder %v568, %v981
        %vm997 = vcmp.eq.s32.totalorder %v568, %v985
        %vm998 = vcmp.eq.s32.totalorder %v569, %v973
        %vm999 = vcmp.eq.s32.totalorder %v569, %v977
        %vm1000 = vcmp.eq.s32.totalorder %v569, %v981
        %vm1001 = vcmp.eq.s32.totalorder %v569, %v985
        %vm1002 = vcmp.eq.s32.totalorder %v570, %v973
        %vm1003 = vcmp.eq.s32.totalorder %v570, %v977
        %vm1004 = vcmp.eq.s32.totalorder %v570, %v981
        %vm1005 = vcmp.eq.s32.totalorder %v570, %v985
        %vm1006 = vcmp.eq.s32.totalorder %v571, %v973
        %vm1007 = vcmp.eq.s32.totalorder %v571, %v977
        %vm1008 = vcmp.eq.s32.totalorder %v571, %v981
        %vm1009 = vcmp.eq.s32.totalorder %v571, %v985
        %vm1010 = vcmp.eq.s32.totalorder %v572, %v973
        %vm1011 = vcmp.eq.s32.totalorder %v572, %v977
        %vm1012 = vcmp.eq.s32.totalorder %v572, %v981
        %vm1013 = vcmp.eq.s32.totalorder %v572, %v985
        %vm1014 = vcmp.eq.s32.totalorder %v573, %v973
        %vm1015 = vcmp.eq.s32.totalorder %v573, %v977
        %vm1016 = vcmp.eq.s32.totalorder %v573, %v981
        %vm1017 = vcmp.eq.s32.totalorder %v573, %v985
        %vm1018 = vcmp.eq.s32.totalorder %v574, %v973
        %vm1019 = vcmp.eq.s32.totalorder %v574, %v977
        %vm1020 = vcmp.eq.s32.totalorder %v574, %v981
        %vm1021 = vcmp.eq.s32.totalorder %v574, %v985
        %vm1022 = vcmp.eq.s32.totalorder %v575, %v973
        %vm1023 = vcmp.eq.s32.totalorder %v575, %v977
        %vm1024 = vcmp.eq.s32.totalorder %v575, %v981
        %vm1025 = vcmp.eq.s32.totalorder %v575, %v985
        %vm1026 = vcmp.eq.s32.totalorder %v576, %v973
        %vm1027 = vcmp.eq.s32.totalorder %v576, %v977
        %vm1028 = vcmp.eq.s32.totalorder %v576, %v981
        %vm1029 = vcmp.eq.s32.totalorder %v576, %v985
        %vm1030 = vcmp.eq.s32.totalorder %v577, %v973
        %vm1031 = vcmp.eq.s32.totalorder %v577, %v977
        %vm1032 = vcmp.eq.s32.totalorder %v577, %v981
        %vm1033 = vcmp.eq.s32.totalorder %v577, %v985
        %vm1034 = vcmp.eq.s32.totalorder %v578, %v973
        %vm1035 = vcmp.eq.s32.totalorder %v578, %v977
        %vm1036 = vcmp.eq.s32.totalorder %v578, %v981
        %vm1037 = vcmp.eq.s32.totalorder %v578, %v985
        %vm1038 = vcmp.eq.s32.totalorder %v579, %v973
        %vm1039 = vcmp.eq.s32.totalorder %v579, %v977
        %vm1040 = vcmp.eq.s32.totalorder %v579, %v981
        %vm1041 = vcmp.eq.s32.totalorder %v579, %v985
        %vm1042 = vcmp.eq.s32.totalorder %v580, %v973
        %vm1043 = vcmp.eq.s32.totalorder %v580, %v977
        %vm1044 = vcmp.eq.s32.totalorder %v580, %v981
        %vm1045 = vcmp.eq.s32.totalorder %v580, %v985
        %vm1046 = vcmp.eq.s32.totalorder %v581, %v973
        %vm1047 = vcmp.eq.s32.totalorder %v581, %v977
        %vm1048 = vcmp.eq.s32.totalorder %v581, %v981
        %vm1049 = vcmp.eq.s32.totalorder %v581, %v985
        %vm1050 = vmor %vm902, %vm986
        %vm1051 = vmor %vm903, %vm987
        %vm1052 = vmor %vm904, %vm988
        %vm1053 = vmor %vm905, %vm989
        %vm1054 = vmor %vm906, %vm990
        %vm1055 = vmor %vm907, %vm991
        %vm1056 = vmor %vm908, %vm992
        %vm1057 = vmor %vm909, %vm993
        %vm1058 = vmor %vm910, %vm994
        %vm1059 = vmor %vm911, %vm995
        %vm1060 = vmor %vm912, %vm996
        %vm1061 = vmor %vm913, %vm997
        %vm1062 = vmor %vm914, %vm998
        %vm1063 = vmor %vm915, %vm999
        %vm1064 = vmor %vm916, %vm1000
        %vm1065 = vmor %vm917, %vm1001
        %vm1066 = vmor %vm918, %vm1002
        %vm1067 = vmor %vm919, %vm1003
        %vm1068 = vmor %vm920, %vm1004
        %vm1069 = vmor %vm921, %vm1005
        %vm1070 = vmor %vm922, %vm1006
        %vm1071 = vmor %vm923, %vm1007
        %vm1072 = vmor %vm924, %vm1008
        %vm1073 = vmor %vm925, %vm1009
        %vm1074 = vmor %vm926, %vm1010
        %vm1075 = vmor %vm927, %vm1011
        %vm1076 = vmor %vm928, %vm1012
        %vm1077 = vmor %vm929, %vm1013
        %vm1078 = vmor %vm930, %vm1014
        %vm1079 = vmor %vm931, %vm1015
        %vm1080 = vmor %vm932, %vm1016
        %vm1081 = vmor %vm933, %vm1017
        %vm1082 = vmor %vm934, %vm1018
        %vm1083 = vmor %vm935, %vm1019
        %vm1084 = vmor %vm936, %vm1020
        %vm1085 = vmor %vm937, %vm1021
        %vm1086 = vmor %vm938, %vm1022
        %vm1087 = vmor %vm939, %vm1023
        %vm1088 = vmor %vm940, %vm1024
        %vm1089 = vmor %vm941, %vm1025
        %vm1090 = vmor %vm942, %vm1026
        %vm1091 = vmor %vm943, %vm1027
        %vm1092 = vmor %vm944, %vm1028
        %vm1093 = vmor %vm945, %vm1029
        %vm1094 = vmor %vm946, %vm1030
        %vm1095 = vmor %vm947, %vm1031
        %vm1096 = vmor %vm948, %vm1032
        %vm1097 = vmor %vm949, %vm1033
        %vm1098 = vmor %vm950, %vm1034
        %vm1099 = vmor %vm951, %vm1035
        %vm1100 = vmor %vm952, %vm1036
        %vm1101 = vmor %vm953, %vm1037
        %vm1102 = vmor %vm954, %vm1038
        %vm1103 = vmor %vm955, %vm1039
        %vm1104 = vmor %vm956, %vm1040
        %vm1105 = vmor %vm957, %vm1041
        %vm1106 = vmor %vm958, %vm1042
        %vm1107 = vmor %vm959, %vm1043
        %vm1108 = vmor %vm960, %vm1044
        %vm1109 = vmor %vm961, %vm1045
        %vm1110 = vmor %vm962, %vm1046
        %vm1111 = vmor %vm963, %vm1047
        %vm1112 = vmor %vm964, %vm1048
        %vm1113 = vmor %vm965, %vm1049
        %v1114 = vadd.s32 %v582, 65
        %v1115 = vadd.s32 %v583, 65
        %v1116 = vadd.s32 %v584, 65
        %v1117 = vadd.s32 %v585, 65
        %v1118 = vlaneseq
        %v1119 = vshrl.u32 %v1118, 7
        %v1120 = vsub.s32 4, %v1119
        %v1121 = vrot.slane %v1114, %v1120
        %v1122 = vlaneseq
        %v1123 = vshrl.u32 %v1122, 7
        %v1124 = vsub.s32 4, %v1123
        %v1125 = vrot.slane %v1115, %v1124
        %v1126 = vlaneseq
        %v1127 = vshrl.u32 %v1126, 7
        %v1128 = vsub.s32 4, %v1127
        %v1129 = vrot.slane %v1116, %v1128
        %v1130 = vlaneseq
        %v1131 = vshrl.u32 %v1130, 7
        %v1132 = vsub.s32 4, %v1131
        %v1133 = vrot.slane %v1117, %v1132
        %vm1134 = vcmp.eq.s32.totalorder %v464, %v1121
        %vm1135 = vcmp.eq.s32.totalorder %v464, %v1125
        %vm1136 = vcmp.eq.s32.totalorder %v464, %v1129
        %vm1137 = vcmp.eq.s32.totalorder %v464, %v1133
        %vm1138 = vcmp.eq.s32.totalorder %v465, %v1121
        %vm1139 = vcmp.eq.s32.totalorder %v465, %v1125
        %vm1140 = vcmp.eq.s32.totalorder %v465, %v1129
        %vm1141 = vcmp.eq.s32.totalorder %v465, %v1133
        %vm1142 = vcmp.eq.s32.totalorder %v568, %v1121
        %vm1143 = vcmp.eq.s32.totalorder %v568, %v1125
        %vm1144 = vcmp.eq.s32.totalorder %v568, %v1129
        %vm1145 = vcmp.eq.s32.totalorder %v568, %v1133
        %vm1146 = vcmp.eq.s32.totalorder %v569, %v1121
        %vm1147 = vcmp.eq.s32.totalorder %v569, %v1125
        %vm1148 = vcmp.eq.s32.totalorder %v569, %v1129
        %vm1149 = vcmp.eq.s32.totalorder %v569, %v1133
        %vm1150 = vcmp.eq.s32.totalorder %v570, %v1121
        %vm1151 = vcmp.eq.s32.totalorder %v570, %v1125
        %vm1152 = vcmp.eq.s32.totalorder %v570, %v1129
        %vm1153 = vcmp.eq.s32.totalorder %v570, %v1133
        %vm1154 = vcmp.eq.s32.totalorder %v571, %v1121
        %vm1155 = vcmp.eq.s32.totalorder %v571, %v1125
        %vm1156 = vcmp.eq.s32.totalorder %v571, %v1129
        %vm1157 = vcmp.eq.s32.totalorder %v571, %v1133
        %vm1158 = vcmp.eq.s32.totalorder %v572, %v1121
        %vm1159 = vcmp.eq.s32.totalorder %v572, %v1125
        %vm1160 = vcmp.eq.s32.totalorder %v572, %v1129
        %vm1161 = vcmp.eq.s32.totalorder %v572, %v1133
        %vm1162 = vcmp.eq.s32.totalorder %v573, %v1121
        %vm1163 = vcmp.eq.s32.totalorder %v573, %v1125
        %vm1164 = vcmp.eq.s32.totalorder %v573, %v1129
        %vm1165 = vcmp.eq.s32.totalorder %v573, %v1133
        %vm1166 = vcmp.eq.s32.totalorder %v574, %v1121
        %vm1167 = vcmp.eq.s32.totalorder %v574, %v1125
        %vm1168 = vcmp.eq.s32.totalorder %v574, %v1129
        %vm1169 = vcmp.eq.s32.totalorder %v574, %v1133
        %vm1170 = vcmp.eq.s32.totalorder %v575, %v1121
        %vm1171 = vcmp.eq.s32.totalorder %v575, %v1125
        %vm1172 = vcmp.eq.s32.totalorder %v575, %v1129
        %vm1173 = vcmp.eq.s32.totalorder %v575, %v1133
        %vm1174 = vcmp.eq.s32.totalorder %v576, %v1121
        %vm1175 = vcmp.eq.s32.totalorder %v576, %v1125
        %vm1176 = vcmp.eq.s32.totalorder %v576, %v1129
        %vm1177 = vcmp.eq.s32.totalorder %v576, %v1133
        %vm1178 = vcmp.eq.s32.totalorder %v577, %v1121
        %vm1179 = vcmp.eq.s32.totalorder %v577, %v1125
        %vm1180 = vcmp.eq.s32.totalorder %v577, %v1129
        %vm1181 = vcmp.eq.s32.totalorder %v577, %v1133
        %vm1182 = vcmp.eq.s32.totalorder %v578, %v1121
        %vm1183 = vcmp.eq.s32.totalorder %v578, %v1125
        %vm1184 = vcmp.eq.s32.totalorder %v578, %v1129
        %vm1185 = vcmp.eq.s32.totalorder %v578, %v1133
        %vm1186 = vcmp.eq.s32.totalorder %v579, %v1121
        %vm1187 = vcmp.eq.s32.totalorder %v579, %v1125
        %vm1188 = vcmp.eq.s32.totalorder %v579, %v1129
        %vm1189 = vcmp.eq.s32.totalorder %v579, %v1133
        %vm1190 = vcmp.eq.s32.totalorder %v580, %v1121
        %vm1191 = vcmp.eq.s32.totalorder %v580, %v1125
        %vm1192 = vcmp.eq.s32.totalorder %v580, %v1129
        %vm1193 = vcmp.eq.s32.totalorder %v580, %v1133
        %vm1194 = vcmp.eq.s32.totalorder %v581, %v1121
        %vm1195 = vcmp.eq.s32.totalorder %v581, %v1125
        %vm1196 = vcmp.eq.s32.totalorder %v581, %v1129
        %vm1197 = vcmp.eq.s32.totalorder %v581, %v1133
        %vm1198 = vmor %vm1050, %vm1134
        %vm1199 = vmor %vm1051, %vm1135
        %vm1200 = vmor %vm1052, %vm1136
        %vm1201 = vmor %vm1053, %vm1137
        %vm1202 = vmor %vm1054, %vm1138
        %vm1203 = vmor %vm1055, %vm1139
        %vm1204 = vmor %vm1056, %vm1140
        %vm1205 = vmor %vm1057, %vm1141
        %vm1206 = vmor %vm1058, %vm1142
        %vm1207 = vmor %vm1059, %vm1143
        %vm1208 = vmor %vm1060, %vm1144
        %vm1209 = vmor %vm1061, %vm1145
        %vm1210 = vmor %vm1062, %vm1146
        %vm1211 = vmor %vm1063, %vm1147
        %vm1212 = vmor %vm1064, %vm1148
        %vm1213 = vmor %vm1065, %vm1149
        %vm1214 = vmor %vm1066, %vm1150
        %vm1215 = vmor %vm1067, %vm1151
        %vm1216 = vmor %vm1068, %vm1152
        %vm1217 = vmor %vm1069, %vm1153
        %vm1218 = vmor %vm1070, %vm1154
        %vm1219 = vmor %vm1071, %vm1155
        %vm1220 = vmor %vm1072, %vm1156
        %vm1221 = vmor %vm1073, %vm1157
        %vm1222 = vmor %vm1074, %vm1158
        %vm1223 = vmor %vm1075, %vm1159
        %vm1224 = vmor %vm1076, %vm1160
        %vm1225 = vmor %vm1077, %vm1161
        %vm1226 = vmor %vm1078, %vm1162
        %vm1227 = vmor %vm1079, %vm1163
        %vm1228 = vmor %vm1080, %vm1164
        %vm1229 = vmor %vm1081, %vm1165
        %vm1230 = vmor %vm1082, %vm1166
        %vm1231 = vmor %vm1083, %vm1167
        %vm1232 = vmor %vm1084, %vm1168
        %vm1233 = vmor %vm1085, %vm1169
        %vm1234 = vmor %vm1086, %vm1170
        %vm1235 = vmor %vm1087, %vm1171
        %vm1236 = vmor %vm1088, %vm1172
        %vm1237 = vmor %vm1089, %vm1173
        %vm1238 = vmor %vm1090, %vm1174
        %vm1239 = vmor %vm1091, %vm1175
        %vm1240 = vmor %vm1092, %vm1176
        %vm1241 = vmor %vm1093, %vm1177
        %vm1242 = vmor %vm1094, %vm1178
        %vm1243 = vmor %vm1095, %vm1179
        %vm1244 = vmor %vm1096, %vm1180
        %vm1245 = vmor %vm1097, %vm1181
        %vm1246 = vmor %vm1098, %vm1182
        %vm1247 = vmor %vm1099, %vm1183
        %vm1248 = vmor %vm1100, %vm1184
        %vm1249 = vmor %vm1101, %vm1185
        %vm1250 = vmor %vm1102, %vm1186
        %vm1251 = vmor %vm1103, %vm1187
        %vm1252 = vmor %vm1104, %vm1188
        %vm1253 = vmor %vm1105, %vm1189
        %vm1254 = vmor %vm1106, %vm1190
        %vm1255 = vmor %vm1107, %vm1191
        %vm1256 = vmor %vm1108, %vm1192
        %vm1257 = vmor %vm1109, %vm1193
        %vm1258 = vmor %vm1110, %vm1194
        %vm1259 = vmor %vm1111, %vm1195
        %vm1260 = vmor %vm1112, %vm1196
        %vm1261 = vmor %vm1113, %vm1197
        %v1262 = vadd.s32 %v582, 78
        %v1263 = vadd.s32 %v583, 78
        %v1264 = vadd.s32 %v584, 78
        %v1265 = vadd.s32 %v585, 78
        %v1266 = vlaneseq
        %v1267 = vshrl.u32 %v1266, 7
        %v1268 = vsub.s32 5, %v1267
        %v1269 = vrot.slane %v1262, %v1268
        %v1270 = vlaneseq
        %v1271 = vshrl.u32 %v1270, 7
        %v1272 = vsub.s32 5, %v1271
        %v1273 = vrot.slane %v1263, %v1272
        %v1274 = vlaneseq
        %v1275 = vshrl.u32 %v1274, 7
        %v1276 = vsub.s32 5, %v1275
        %v1277 = vrot.slane %v1264, %v1276
        %v1278 = vlaneseq
        %v1279 = vshrl.u32 %v1278, 7
        %v1280 = vsub.s32 5, %v1279
        %v1281 = vrot.slane %v1265, %v1280
        %vm1282 = vcmp.eq.s32.totalorder %v464, %v1269
        %vm1283 = vcmp.eq.s32.totalorder %v464, %v1273
        %vm1284 = vcmp.eq.s32.totalorder %v464, %v1277
        %vm1285 = vcmp.eq.s32.totalorder %v464, %v1281
        %vm1286 = vcmp.eq.s32.totalorder %v465, %v1269
        %vm1287 = vcmp.eq.s32.totalorder %v465, %v1273
        %vm1288 = vcmp.eq.s32.totalorder %v465, %v1277
        %vm1289 = vcmp.eq.s32.totalorder %v465, %v1281
        %vm1290 = vcmp.eq.s32.totalorder %v568, %v1269
        %vm1291 = vcmp.eq.s32.totalorder %v568, %v1273
        %vm1292 = vcmp.eq.s32.totalorder %v568, %v1277
        %vm1293 = vcmp.eq.s32.totalorder %v568, %v1281
        %vm1294 = vcmp.eq.s32.totalorder %v569, %v1269
        %vm1295 = vcmp.eq.s32.totalorder %v569, %v1273
        %vm1296 = vcmp.eq.s32.totalorder %v569, %v1277
        %vm1297 = vcmp.eq.s32.totalorder %v569, %v1281
        %vm1298 = vcmp.eq.s32.totalorder %v570, %v1269
        %vm1299 = vcmp.eq.s32.totalorder %v570, %v1273
        %vm1300 = vcmp.eq.s32.totalorder %v570, %v1277
        %vm1301 = vcmp.eq.s32.totalorder %v570, %v1281
        %vm1302 = vcmp.eq.s32.totalorder %v571, %v1269
        %vm1303 = vcmp.eq.s32.totalorder %v571, %v1273
        %vm1304 = vcmp.eq.s32.totalorder %v571, %v1277
        %vm1305 = vcmp.eq.s32.totalorder %v571, %v1281
        %vm1306 = vcmp.eq.s32.totalorder %v572, %v1269
        %vm1307 = vcmp.eq.s32.totalorder %v572, %v1273
        %vm1308 = vcmp.eq.s32.totalorder %v572, %v1277
        %vm1309 = vcmp.eq.s32.totalorder %v572, %v1281
        %vm1310 = vcmp.eq.s32.totalorder %v573, %v1269
        %vm1311 = vcmp.eq.s32.totalorder %v573, %v1273
        %vm1312 = vcmp.eq.s32.totalorder %v573, %v1277
        %vm1313 = vcmp.eq.s32.totalorder %v573, %v1281
        %vm1314 = vcmp.eq.s32.totalorder %v574, %v1269
        %vm1315 = vcmp.eq.s32.totalorder %v574, %v1273
        %vm1316 = vcmp.eq.s32.totalorder %v574, %v1277
        %vm1317 = vcmp.eq.s32.totalorder %v574, %v1281
        %vm1318 = vcmp.eq.s32.totalorder %v575, %v1269
        %vm1319 = vcmp.eq.s32.totalorder %v575, %v1273
        %vm1320 = vcmp.eq.s32.totalorder %v575, %v1277
        %vm1321 = vcmp.eq.s32.totalorder %v575, %v1281
        %vm1322 = vcmp.eq.s32.totalorder %v576, %v1269
        %vm1323 = vcmp.eq.s32.totalorder %v576, %v1273
        %vm1324 = vcmp.eq.s32.totalorder %v576, %v1277
        %vm1325 = vcmp.eq.s32.totalorder %v576, %v1281
        %vm1326 = vcmp.eq.s32.totalorder %v577, %v1269
        %vm1327 = vcmp.eq.s32.totalorder %v577, %v1273
        %vm1328 = vcmp.eq.s32.totalorder %v577, %v1277
        %vm1329 = vcmp.eq.s32.totalorder %v577, %v1281
        %vm1330 = vcmp.eq.s32.totalorder %v578, %v1269
        %vm1331 = vcmp.eq.s32.totalorder %v578, %v1273
        %vm1332 = vcmp.eq.s32.totalorder %v578, %v1277
        %vm1333 = vcmp.eq.s32.totalorder %v578, %v1281
        %vm1334 = vcmp.eq.s32.totalorder %v579, %v1269
        %vm1335 = vcmp.eq.s32.totalorder %v579, %v1273
        %vm1336 = vcmp.eq.s32.totalorder %v579, %v1277
        %vm1337 = vcmp.eq.s32.totalorder %v579, %v1281
        %vm1338 = vcmp.eq.s32.totalorder %v580, %v1269
        %vm1339 = vcmp.eq.s32.totalorder %v580, %v1273
        %vm1340 = vcmp.eq.s32.totalorder %v580, %v1277
        %vm1341 = vcmp.eq.s32.totalorder %v580, %v1281
        %vm1342 = vcmp.eq.s32.totalorder %v581, %v1269
        %vm1343 = vcmp.eq.s32.totalorder %v581, %v1273
        %vm1344 = vcmp.eq.s32.totalorder %v581, %v1277
        %vm1345 = vcmp.eq.s32.totalorder %v581, %v1281
        %vm1346 = vmor %vm1198, %vm1282
        %vm1347 = vmor %vm1199, %vm1283
        %vm1348 = vmor %vm1200, %vm1284
        %vm1349 = vmor %vm1201, %vm1285
        %vm1350 = vmor %vm1202, %vm1286
        %vm1351 = vmor %vm1203, %vm1287
        %vm1352 = vmor %vm1204, %vm1288
        %vm1353 = vmor %vm1205, %vm1289
        %vm1354 = vmor %vm1206, %vm1290
        %vm1355 = vmor %vm1207, %vm1291
        %vm1356 = vmor %vm1208, %vm1292
        %vm1357 = vmor %vm1209, %vm1293
        %vm1358 = vmor %vm1210, %vm1294
        %vm1359 = vmor %vm1211, %vm1295
        %vm1360 = vmor %vm1212, %vm1296
        %vm1361 = vmor %vm1213, %vm1297
        %vm1362 = vmor %vm1214, %vm1298
        %vm1363 = vmor %vm1215, %vm1299
        %vm1364 = vmor %vm1216, %vm1300
        %vm1365 = vmor %vm1217, %vm1301
        %vm1366 = vmor %vm1218, %vm1302
        %vm1367 = vmor %vm1219, %vm1303
        %vm1368 = vmor %vm1220, %vm1304
        %vm1369 = vmor %vm1221, %vm1305
        %vm1370 = vmor %vm1222, %vm1306
        %vm1371 = vmor %vm1223, %vm1307
        %vm1372 = vmor %vm1224, %vm1308
        %vm1373 = vmor %vm1225, %vm1309
        %vm1374 = vmor %vm1226, %vm1310
        %vm1375 = vmor %vm1227, %vm1311
        %vm1376 = vmor %vm1228, %vm1312
        %vm1377 = vmor %vm1229, %vm1313
        %vm1378 = vmor %vm1230, %vm1314
        %vm1379 = vmor %vm1231, %vm1315
        %vm1380 = vmor %vm1232, %vm1316
        %vm1381 = vmor %vm1233, %vm1317
        %vm1382 = vmor %vm1234, %vm1318
        %vm1383 = vmor %vm1235, %vm1319
        %vm1384 = vmor %vm1236, %vm1320
        %vm1385 = vmor %vm1237, %vm1321
        %vm1386 = vmor %vm1238, %vm1322
        %vm1387 = vmor %vm1239, %vm1323
        %vm1388 = vmor %vm1240, %vm1324
        %vm1389 = vmor %vm1241, %vm1325
        %vm1390 = vmor %vm1242, %vm1326
        %vm1391 = vmor %vm1243, %vm1327
        %vm1392 = vmor %vm1244, %vm1328
        %vm1393 = vmor %vm1245, %vm1329
        %vm1394 = vmor %vm1246, %vm1330
        %vm1395 = vmor %vm1247, %vm1331
        %vm1396 = vmor %vm1248, %vm1332
        %vm1397 = vmor %vm1249, %vm1333
        %vm1398 = vmor %vm1250, %vm1334
        %vm1399 = vmor %vm1251, %vm1335
        %vm1400 = vmor %vm1252, %vm1336
        %vm1401 = vmor %vm1253, %vm1337
        %vm1402 = vmor %vm1254, %vm1338
        %vm1403 = vmor %vm1255, %vm1339
        %vm1404 = vmor %vm1256, %vm1340
        %vm1405 = vmor %vm1257, %vm1341
        %vm1406 = vmor %vm1258, %vm1342
        %vm1407 = vmor %vm1259, %vm1343
        %vm1408 = vmor %vm1260, %vm1344
        %vm1409 = vmor %vm1261, %vm1345
        %v1410 = vcvt.f32.s32.to.zero.pseudo %v262
        %v1411 = vcvt.f32.s32.to.zero.pseudo %v263
        %v1412 = vcvt.f32.s32.to.zero.pseudo %v264
        %v1413 = vcvt.f32.s32.to.zero.pseudo %v265
        %v1414 = vadd.s32 %v1410, 91
        %v1415 = vadd.s32 %v1411, 91
        %v1416 = vadd.s32 %v1412, 91
        %v1417 = vadd.s32 %v1413, 91
        %v1418 = vlaneseq
        %v1419 = vshrl.u32 %v1418, 7
        %v1420 = vsub.s32 4, %v1419
        %v1421 = vrot.slane %v1414, %v1420
        %v1422 = vlaneseq
        %v1423 = vshrl.u32 %v1422, 7
        %v1424 = vsub.s32 4, %v1423
        %v1425 = vrot.slane %v1415, %v1424
        %v1426 = vlaneseq
        %v1427 = vshrl.u32 %v1426, 7
        %v1428 = vsub.s32 4, %v1427
        %v1429 = vrot.slane %v1416, %v1428
        %v1430 = vlaneseq
        %v1431 = vshrl.u32 %v1430, 7
        %v1432 = vsub.s32 4, %v1431
        %v1433 = vrot.slane %v1417, %v1432
        %vm1434 = vcmp.eq.s32.totalorder %v464, %v1421
        %vm1435 = vcmp.eq.s32.totalorder %v464, %v1425
        %vm1436 = vcmp.eq.s32.totalorder %v464, %v1429
        %vm1437 = vcmp.eq.s32.totalorder %v464, %v1433
        %vm1438 = vcmp.eq.s32.totalorder %v465, %v1421
        %vm1439 = vcmp.eq.s32.totalorder %v465, %v1425
        %vm1440 = vcmp.eq.s32.totalorder %v465, %v1429
        %vm1441 = vcmp.eq.s32.totalorder %v465, %v1433
        %vm1442 = vcmp.eq.s32.totalorder %v568, %v1421
        %vm1443 = vcmp.eq.s32.totalorder %v568, %v1425
        %vm1444 = vcmp.eq.s32.totalorder %v568, %v1429
        %vm1445 = vcmp.eq.s32.totalorder %v568, %v1433
        %vm1446 = vcmp.eq.s32.totalorder %v569, %v1421
        %vm1447 = vcmp.eq.s32.totalorder %v569, %v1425
        %vm1448 = vcmp.eq.s32.totalorder %v569, %v1429
        %vm1449 = vcmp.eq.s32.totalorder %v569, %v1433
        %vm1450 = vcmp.eq.s32.totalorder %v570, %v1421
        %vm1451 = vcmp.eq.s32.totalorder %v570, %v1425
        %vm1452 = vcmp.eq.s32.totalorder %v570, %v1429
        %vm1453 = vcmp.eq.s32.totalorder %v570, %v1433
        %vm1454 = vcmp.eq.s32.totalorder %v571, %v1421
        %vm1455 = vcmp.eq.s32.totalorder %v571, %v1425
        %vm1456 = vcmp.eq.s32.totalorder %v571, %v1429
        %vm1457 = vcmp.eq.s32.totalorder %v571, %v1433
        %vm1458 = vcmp.eq.s32.totalorder %v572, %v1421
        %vm1459 = vcmp.eq.s32.totalorder %v572, %v1425
        %vm1460 = vcmp.eq.s32.totalorder %v572, %v1429
        %vm1461 = vcmp.eq.s32.totalorder %v572, %v1433
        %vm1462 = vcmp.eq.s32.totalorder %v573, %v1421
        %vm1463 = vcmp.eq.s32.totalorder %v573, %v1425
        %vm1464 = vcmp.eq.s32.totalorder %v573, %v1429
        %vm1465 = vcmp.eq.s32.totalorder %v573, %v1433
        %vm1466 = vcmp.eq.s32.totalorder %v574, %v1421
        %vm1467 = vcmp.eq.s32.totalorder %v574, %v1425
        %vm1468 = vcmp.eq.s32.totalorder %v574, %v1429
        %vm1469 = vcmp.eq.s32.totalorder %v574, %v1433
        %vm1470 = vcmp.eq.s32.totalorder %v575, %v1421
        %vm1471 = vcmp.eq.s32.totalorder %v575, %v1425
        %vm1472 = vcmp.eq.s32.totalorder %v575, %v1429
        %vm1473 = vcmp.eq.s32.totalorder %v575, %v1433
        %vm1474 = vcmp.eq.s32.totalorder %v576, %v1421
        %vm1475 = vcmp.eq.s32.totalorder %v576, %v1425
        %vm1476 = vcmp.eq.s32.totalorder %v576, %v1429
        %vm1477 = vcmp.eq.s32.totalorder %v576, %v1433
        %vm1478 = vcmp.eq.s32.totalorder %v577, %v1421
        %vm1479 = vcmp.eq.s32.totalorder %v577, %v1425
        %vm1480 = vcmp.eq.s32.totalorder %v577, %v1429
        %vm1481 = vcmp.eq.s32.totalorder %v577, %v1433
        %vm1482 = vcmp.eq.s32.totalorder %v578, %v1421
        %vm1483 = vcmp.eq.s32.totalorder %v578, %v1425
        %vm1484 = vcmp.eq.s32.totalorder %v578, %v1429
        %vm1485 = vcmp.eq.s32.totalorder %v578, %v1433
        %vm1486 = vcmp.eq.s32.totalorder %v579, %v1421
        %vm1487 = vcmp.eq.s32.totalorder %v579, %v1425
        %vm1488 = vcmp.eq.s32.totalorder %v579, %v1429
        %vm1489 = vcmp.eq.s32.totalorder %v579, %v1433
        %vm1490 = vcmp.eq.s32.totalorder %v580, %v1421
        %vm1491 = vcmp.eq.s32.totalorder %v580, %v1425
        %vm1492 = vcmp.eq.s32.totalorder %v580, %v1429
        %vm1493 = vcmp.eq.s32.totalorder %v580, %v1433
        %vm1494 = vcmp.eq.s32.totalorder %v581, %v1421
        %vm1495 = vcmp.eq.s32.totalorder %v581, %v1425
        %vm1496 = vcmp.eq.s32.totalorder %v581, %v1429
        %vm1497 = vcmp.eq.s32.totalorder %v581, %v1433
        %vm1498 = vmor %vm1346, %vm1434
        %vm1499 = vmor %vm1347, %vm1435
        %vm1500 = vmor %vm1348, %vm1436
        %vm1501 = vmor %vm1349, %vm1437
        %vm1502 = vmor %vm1350, %vm1438
        %vm1503 = vmor %vm1351, %vm1439
        %vm1504 = vmor %vm1352, %vm1440
        %vm1505 = vmor %vm1353, %vm1441
        %vm1506 = vmor %vm1354, %vm1442
        %vm1507 = vmor %vm1355, %vm1443
        %vm1508 = vmor %vm1356, %vm1444
        %vm1509 = vmor %vm1357, %vm1445
        %vm1510 = vmor %vm1358, %vm1446
        %vm1511 = vmor %vm1359, %vm1447
        %vm1512 = vmor %vm1360, %vm1448
        %vm1513 = vmor %vm1361, %vm1449
        %vm1514 = vmor %vm1362, %vm1450
        %vm1515 = vmor %vm1363, %vm1451
        %vm1516 = vmor %vm1364, %vm1452
        %vm1517 = vmor %vm1365, %vm1453
        %vm1518 = vmor %vm1366, %vm1454
        %vm1519 = vmor %vm1367, %vm1455
        %vm1520 = vmor %vm1368, %vm1456
        %vm1521 = vmor %vm1369, %vm1457
        %vm1522 = vmor %vm1370, %vm1458
        %vm1523 = vmor %vm1371, %vm1459
        %vm1524 = vmor %vm1372, %vm1460
        %vm1525 = vmor %vm1373, %vm1461
        %vm1526 = vmor %vm1374, %vm1462
        %vm1527 = vmor %vm1375, %vm1463
        %vm1528 = vmor %vm1376, %vm1464
        %vm1529 = vmor %vm1377, %vm1465
        %vm1530 = vmor %vm1378, %vm1466
        %vm1531 = vmor %vm1379, %vm1467
        %vm1532 = vmor %vm1380, %vm1468
        %vm1533 = vmor %vm1381, %vm1469
        %vm1534 = vmor %vm1382, %vm1470
        %vm1535 = vmor %vm1383, %vm1471
        %vm1536 = vmor %vm1384, %vm1472
        %vm1537 = vmor %vm1385, %vm1473
        %vm1538 = vmor %vm1386, %vm1474
        %vm1539 = vmor %vm1387, %vm1475
        %vm1540 = vmor %vm1388, %vm1476
        %vm1541 = vmor %vm1389, %vm1477
        %vm1542 = vmor %vm1390, %vm1478
        %vm1543 = vmor %vm1391, %vm1479
        %vm1544 = vmor %vm1392, %vm1480
        %vm1545 = vmor %vm1393, %vm1481
        %vm1546 = vmor %vm1394, %vm1482
        %vm1547 = vmor %vm1395, %vm1483
        %vm1548 = vmor %vm1396, %vm1484
        %vm1549 = vmor %vm1397, %vm1485
        %vm1550 = vmor %vm1398, %vm1486
        %vm1551 = vmor %vm1399, %vm1487
        %vm1552 = vmor %vm1400, %vm1488
        %vm1553 = vmor %vm1401, %vm1489
        %vm1554 = vmor %vm1402, %vm1490
        %vm1555 = vmor %vm1403, %vm1491
        %vm1556 = vmor %vm1404, %vm1492
        %vm1557 = vmor %vm1405, %vm1493
        %vm1558 = vmor %vm1406, %vm1494
        %vm1559 = vmor %vm1407, %vm1495
        %vm1560 = vmor %vm1408, %vm1496
        %vm1561 = vmor %vm1409, %vm1497
        %v1562 = vsel %vm1498, 1.0, %v560
        %v1563 = vsel %vm1499, 1.0, %v561
        %v1564 = vsel %vm1500, 1.0, %v562
        %v1565 = vsel %vm1501, 1.0, %v563
        %v1566 = vsel %vm1502, 1.0, %v564
        %v1567 = vsel %vm1503, 1.0, %v565
        %v1568 = vsel %vm1504, 1.0, %v566
        %v1569 = vsel %vm1505, 1.0, %v567
        %v1570 = vsel %vm1506, 1.0, 0.0
        %v1571 = vsel %vm1507, 1.0, 0.0
        %v1572 = vsel %vm1508, 1.0, 0.0
        %v1573 = vsel %vm1509, 1.0, 0.0
        %v1574 = vsel %vm1510, 1.0, 0.0
        %v1575 = vsel %vm1511, 1.0, 0.0
        %v1576 = vsel %vm1512, 1.0, 0.0
        %v1577 = vsel %vm1513, 1.0, 0.0
        %v1578 = vsel %vm1514, 1.0, 0.0
        %v1579 = vsel %vm1515, 1.0, 0.0
        %v1580 = vsel %vm1516, 1.0, 0.0
        %v1581 = vsel %vm1517, 1.0, 0.0
        %v1582 = vsel %vm1518, 1.0, 0.0
        %v1583 = vsel %vm1519, 1.0, 0.0
        %v1584 = vsel %vm1520, 1.0, 0.0
        %v1585 = vsel %vm1521, 1.0, 0.0
        %v1586 = vsel %vm1522, 1.0, 0.0
        %v1587 = vsel %vm1523, 1.0, 0.0
        %v1588 = vsel %vm1524, 1.0, 0.0
        %v1589 = vsel %vm1525, 1.0, 0.0
        %v1590 = vsel %vm1526, 1.0, 0.0
        %v1591 = vsel %vm1527, 1.0, 0.0
        %v1592 = vsel %vm1528, 1.0, 0.0
        %v1593 = vsel %vm1529, 1.0, 0.0
        %v1594 = vsel %vm1530, 1.0, 0.0
        %v1595 = vsel %vm1531, 1.0, 0.0
        %v1596 = vsel %vm1532, 1.0, 0.0
        %v1597 = vsel %vm1533, 1.0, 0.0
        %v1598 = vsel %vm1534, 1.0, 0.0
        %v1599 = vsel %vm1535, 1.0, 0.0
        %v1600 = vsel %vm1536, 1.0, 0.0
        %v1601 = vsel %vm1537, 1.0, 0.0
        %v1602 = vsel %vm1538, 1.0, 0.0
        %v1603 = vsel %vm1539, 1.0, 0.0
        %v1604 = vsel %vm1540, 1.0, 0.0
        %v1605 = vsel %vm1541, 1.0, 0.0
        %v1606 = vsel %vm1542, 1.0, 0.0
        %v1607 = vsel %vm1543, 1.0, 0.0
        %v1608 = vsel %vm1544, 1.0, 0.0
        %v1609 = vsel %vm1545, 1.0, 0.0
        %v1610 = vsel %vm1546, 1.0, 0.0
        %v1611 = vsel %vm1547, 1.0, 0.0
        %v1612 = vsel %vm1548, 1.0, 0.0
        %v1613 = vsel %vm1549, 1.0, 0.0
        %v1614 = vsel %vm1550, 1.0, 0.0
        %v1615 = vsel %vm1551, 1.0, 0.0
        %v1616 = vsel %vm1552, 1.0, 0.0
        %v1617 = vsel %vm1553, 1.0, 0.0
        %v1618 = vsel %vm1554, 1.0, 0.0
        %v1619 = vsel %vm1555, 1.0, 0.0
        %v1620 = vsel %vm1556, 1.0, 0.0
        %v1621 = vsel %vm1557, 1.0, 0.0
        %v1622 = vsel %vm1558, 1.0, 0.0
        %v1623 = vsel %vm1559, 1.0, 0.0
        %v1624 = vsel %vm1560, 1.0, 0.0
        %v1625 = vsel %vm1561, 1.0, 0.0
        %1627 = vset.pattern.permute.xlu0 0
        %1628 = vperm.xlu0 %1627, %v272
        %v1629 = vpop.permute.xlu0 %1628
        %1632 = vset.pattern.permute.xlu0 0
        %1633 = vperm.xlu0 %1632, %v273
        %v1634 = vpop.permute.xlu0 %1633
        %1637 = vset.pattern.permute.xlu0 0
        %1638 = vperm.xlu0 %1637, %v274
        %v1639 = vpop.permute.xlu0 %1638
        %1642 = vset.pattern.permute.xlu0 0
        %1643 = vperm.xlu0 %1642, %v275
        %v1644 = vpop.permute.xlu0 %1643
        %1646 = vmatprep.subr.mxu0 %v1563
        %1647 = vmatpush1.msra.mxu0 %v1562
        %1648 = vmatprep.subr.mxu0 %v1567
        %1649 = vmatpush1.msra.mxu0 %v1566
        %1650 = vmatprep.subr.mxu0 %v1571
        %1651 = vmatpush1.msra.mxu0 %v1570
        %1652 = vmatprep.subr.mxu0 %v1575
        %1653 = vmatpush1.msra.mxu0 %v1574
        %1654 = vmatprep.subr.mxu0 %v1579
        %1655 = vmatpush1.msra.mxu0 %v1578
        %1656 = vmatprep.subr.mxu0 %v1583
        %1657 = vmatpush1.msra.mxu0 %v1582
        %1658 = vmatprep.subr.mxu0 %v1587
        %1659 = vmatpush1.msra.mxu0 %v1586
        %1660 = vmatprep.subr.mxu0 %v1591
        %1661 = vmatpush1.msra.mxu0 %v1590
        %1662 = vmatprep.subr.mxu0 %v1595
        %1663 = vmatpush1.msra.mxu0 %v1594
        %1664 = vmatprep.subr.mxu0 %v1599
        %1665 = vmatpush1.msra.mxu0 %v1598
        %1666 = vmatprep.subr.mxu0 %v1603
        %1667 = vmatpush1.msra.mxu0 %v1602
        %1668 = vmatprep.subr.mxu0 %v1607
        %1669 = vmatpush1.msra.mxu0 %v1606
        %1670 = vmatprep.subr.mxu0 %v1611
        %1671 = vmatpush1.msra.mxu0 %v1610
        %1672 = vmatprep.subr.mxu0 %v1615
        %1673 = vmatpush1.msra.mxu0 %v1614
        %1674 = vmatprep.subr.mxu0 %v1619
        %1675 = vmatpush1.msra.mxu0 %v1618
        %1676 = vmatprep.subr.mxu0 %v1623
        %1677 = vmatpush1.msra.mxu0 %v1622
        %1678 = vmatprep.subr.mxu0 0.0
        %1679 = vmatpush1.msra.mxu0 0.0
        %1680 = vmatprep.subr.mxu0 0.0
        %1681 = vmatpush1.msra.mxu0 0.0
        %1682 = vmatprep.subr.mxu0 0.0
        %1683 = vmatpush1.msra.mxu0 0.0
        %1684 = vmatprep.subr.mxu0 0.0
        %1685 = vmatpush1.msra.mxu0 0.0
        %1686 = vmatprep.subr.mxu0 0.0
        %1687 = vmatpush1.msra.mxu0 0.0
        %1688 = vmatprep.subr.mxu0 0.0
        %1689 = vmatpush1.msra.mxu0 0.0
        %1690 = vmatprep.subr.mxu0 0.0
        %1691 = vmatpush1.msra.mxu0 0.0
        %1692 = vmatprep.subr.mxu0 0.0
        %1693 = vmatpush1.msra.mxu0 0.0
        %1694 = vmatprep.subr.mxu0 0.0
        %1695 = vmatpush1.msra.mxu0 0.0
        %1696 = vmatprep.subr.mxu0 0.0
        %1697 = vmatpush1.msra.mxu0 0.0
        %1698 = vmatprep.subr.mxu0 0.0
        %1699 = vmatpush1.msra.mxu0 0.0
        %1700 = vmatprep.subr.mxu0 0.0
        %1701 = vmatpush1.msra.mxu0 0.0
        %1702 = vmatprep.subr.mxu0 0.0
        %1703 = vmatpush1.msra.mxu0 0.0
        %1704 = vmatprep.subr.mxu0 0.0
        %1705 = vmatpush1.msra.mxu0 0.0
        %1706 = vmatprep.subr.mxu0 0.0
        %1707 = vmatpush1.msra.mxu0 0.0
        %1708 = vmatprep.subr.mxu0 0.0
        %1709 = vmatpush1.msra.mxu0 0.0
        %1710 = vmatprep.mubr.f32.mxu0 0.0
        %1711 = vmatmul.mubr.f32.gmra.mrb[0].mxu0 %v268
        %v1712 = vpop.f32.mrb[0].mxu0
        %v1713 = vadd.f32 %v1629, %v1712
        %v1714 = vpop.f32.mrb[0].mxu0
        %v1715 = vadd.f32 %v1629, %v1714
        %1716 = vmatprep.mubr.f32.mxu0 0.0
        %1717 = vmatmul.mubr.f32.gmra.mrb[0].mxu0 %v269
        %v1718 = vpop.f32.mrb[0].mxu0
        %v1719 = vadd.f32 %v1634, %v1718
        %v1720 = vpop.f32.mrb[0].mxu0
        %v1721 = vadd.f32 %v1634, %v1720
        %1722 = vmatprep.mubr.f32.mxu0 0.0
        %1723 = vmatmul.mubr.f32.gmra.mrb[0].mxu0 %v270
        %v1724 = vpop.f32.mrb[0].mxu0
        %v1725 = vadd.f32 %v1639, %v1724
        %v1726 = vpop.f32.mrb[0].mxu0
        %v1727 = vadd.f32 %v1639, %v1726
        %1728 = vmatprep.mubr.f32.mxu0 0.0
        %1729 = vmatmul.mubr.f32.gmra.mrb[0].mxu0 %v271
        %v1730 = vpop.f32.mrb[0].mxu0
        %v1731 = vadd.f32 %v1644, %v1730
        %v1732 = vpop.f32.mrb[0].mxu0
        %v1733 = vadd.f32 %v1644, %v1732
        %1734 = vdwg.mxu0
        %1735 = vmatprep.subr.mxu0 %v1565
        %1736 = vmatpush1.msra.mxu0 %v1564
        %1737 = vmatprep.subr.mxu0 %v1569
        %1738 = vmatpush1.msra.mxu0 %v1568
        %1739 = vmatprep.subr.mxu0 %v1573
        %1740 = vmatpush1.msra.mxu0 %v1572
        %1741 = vmatprep.subr.mxu0 %v1577
        %1742 = vmatpush1.msra.mxu0 %v1576
        %1743 = vmatprep.subr.mxu0 %v1581
        %1744 = vmatpush1.msra.mxu0 %v1580
        %1745 = vmatprep.subr.mxu0 %v1585
        %1746 = vmatpush1.msra.mxu0 %v1584
        %1747 = vmatprep.subr.mxu0 %v1589
        %1748 = vmatpush1.msra.mxu0 %v1588
        %1749 = vmatprep.subr.mxu0 %v1593
        %1750 = vmatpush1.msra.mxu0 %v1592
        %1751 = vmatprep.subr.mxu0 %v1597
        %1752 = vmatpush1.msra.mxu0 %v1596
        %1753 = vmatprep.subr.mxu0 %v1601
        %1754 = vmatpush1.msra.mxu0 %v1600
        %1755 = vmatprep.subr.mxu0 %v1605
        %1756 = vmatpush1.msra.mxu0 %v1604
        %1757 = vmatprep.subr.mxu0 %v1609
        %1758 = vmatpush1.msra.mxu0 %v1608
        %1759 = vmatprep.subr.mxu0 %v1613
        %1760 = vmatpush1.msra.mxu0 %v1612
        %1761 = vmatprep.subr.mxu0 %v1617
        %1762 = vmatpush1.msra.mxu0 %v1616
        %1763 = vmatprep.subr.mxu0 %v1621
        %1764 = vmatpush1.msra.mxu0 %v1620
        %1765 = vmatprep.subr.mxu0 %v1625
        %1766 = vmatpush1.msra.mxu0 %v1624
        %1767 = vmatprep.subr.mxu0 0.0
        %1768 = vmatpush1.msra.mxu0 0.0
        %1769 = vmatprep.subr.mxu0 0.0
        %1770 = vmatpush1.msra.mxu0 0.0
        %1771 = vmatprep.subr.mxu0 0.0
        %1772 = vmatpush1.msra.mxu0 0.0
        %1773 = vmatprep.subr.mxu0 0.0
        %1774 = vmatpush1.msra.mxu0 0.0
        %1775 = vmatprep.subr.mxu0 0.0
        %1776 = vmatpush1.msra.mxu0 0.0
        %1777 = vmatprep.subr.mxu0 0.0
        %1778 = vmatpush1.msra.mxu0 0.0
        %1779 = vmatprep.subr.mxu0 0.0
        %1780 = vmatpush1.msra.mxu0 0.0
        %1781 = vmatprep.subr.mxu0 0.0
        %1782 = vmatpush1.msra.mxu0 0.0
        %1783 = vmatprep.subr.mxu0 0.0
        %1784 = vmatpush1.msra.mxu0 0.0
        %1785 = vmatprep.subr.mxu0 0.0
        %1786 = vmatpush1.msra.mxu0 0.0
        %1787 = vmatprep.subr.mxu0 0.0
        %1788 = vmatpush1.msra.mxu0 0.0
        %1789 = vmatprep.subr.mxu0 0.0
        %1790 = vmatpush1.msra.mxu0 0.0
        %1791 = vmatprep.subr.mxu0 0.0
        %1792 = vmatpush1.msra.mxu0 0.0
        %1793 = vmatprep.subr.mxu0 0.0
        %1794 = vmatpush1.msra.mxu0 0.0
        %1795 = vmatprep.subr.mxu0 0.0
        %1796 = vmatpush1.msra.mxu0 0.0
        %1797 = vmatprep.subr.mxu0 0.0
        %1798 = vmatpush1.msra.mxu0 0.0
        %1799 = vmatprep.mubr.f32.mxu0 0.0
        %1800 = vmatmul.mubr.f32.gmra.mrb[0].mxu0 %v268
        %v1801 = vpop.f32.mrb[0].mxu0
        %v1802 = vadd.f32 %v1629, %v1801
        %v1803 = vpop.f32.mrb[0].mxu0
        %v1804 = vadd.f32 %v1629, %v1803
        %1805 = vmatprep.mubr.f32.mxu0 0.0
        %1806 = vmatmul.mubr.f32.gmra.mrb[0].mxu0 %v269
        %v1807 = vpop.f32.mrb[0].mxu0
        %v1808 = vadd.f32 %v1634, %v1807
        %v1809 = vpop.f32.mrb[0].mxu0
        %v1810 = vadd.f32 %v1634, %v1809
        %1811 = vmatprep.mubr.f32.mxu0 0.0
        %1812 = vmatmul.mubr.f32.gmra.mrb[0].mxu0 %v270
        %v1813 = vpop.f32.mrb[0].mxu0
        %v1814 = vadd.f32 %v1639, %v1813
        %v1815 = vpop.f32.mrb[0].mxu0
        %v1816 = vadd.f32 %v1639, %v1815
        %1817 = vmatprep.mubr.f32.mxu0 0.0
        %1818 = vmatmul.mubr.f32.gmra.mrb[0].mxu0 %v271
        %v1819 = vpop.f32.mrb[0].mxu0
        %v1820 = vadd.f32 %v1644, %v1819
        %v1821 = vpop.f32.mrb[0].mxu0
        %v1822 = vadd.f32 %v1644, %v1821
        %1823 = vdwg.mxu0
        %v1824 = vmax.f32 %v1713, 0.0
        %v1825 = vmax.f32 %v1715, 0.0
        %v1826 = vmax.f32 %v1802, 0.0
        %v1827 = vmax.f32 %v1804, 0.0
        %v1828 = vmax.f32 %v1719, 0.0
        %v1829 = vmax.f32 %v1721, 0.0
        %v1830 = vmax.f32 %v1808, 0.0
        %v1831 = vmax.f32 %v1810, 0.0
        %v1832 = vmax.f32 %v1725, 0.0
        %v1833 = vmax.f32 %v1727, 0.0
        %v1834 = vmax.f32 %v1814, 0.0
        %v1835 = vmax.f32 %v1816, 0.0
        %v1836 = vmax.f32 %v1731, 0.0
        %v1837 = vmax.f32 %v1733, 0.0
        %v1838 = vmax.f32 %v1820, 0.0
        %v1839 = vmax.f32 %v1822, 0.0
        %1841 = vset.pattern.permute.xlu0 32
        %1842 = vperm.xlu0 %1841, %v276
        %v1843 = vpop.permute.xlu0 %1842
        %1846 = vset.pattern.permute.xlu0 32
        %1847 = vperm.xlu0 %1846, %v277
        %v1848 = vpop.permute.xlu0 %1847
        %vm1850 = vcmask 261120
        %v1851 = vsel %vm1850, %v276, 0
        %v1853 = vsel %vm1850, %v277, 0
        %1855 = vmatprep.subr.mxu0 %v1825
        %1856 = vmatpush1.msra.mxu0 %v1824
        %1857 = vmatprep.subr.mxu0 %v1829
        %1858 = vmatpush1.msra.mxu0 %v1828
        %1859 = vmatprep.subr.mxu0 %v1833
        %1860 = vmatpush1.msra.mxu0 %v1832
        %1861 = vmatprep.subr.mxu0 %v1837
        %1862 = vmatpush1.msra.mxu0 %v1836
        %1863 = vmatprep.subr.mxu0 0.0
        %1864 = vmatpush1.msra.mxu0 0.0
        %1865 = vmatprep.subr.mxu0 0.0
        %1866 = vmatpush1.msra.mxu0 0.0
        %1867 = vmatprep.subr.mxu0 0.0
        %1868 = vmatpush1.msra.mxu0 0.0
        %1869 = vmatprep.subr.mxu0 0.0
        %1870 = vmatpush1.msra.mxu0 0.0
        %1871 = vmatprep.subr.mxu0 0.0
        %1872 = vmatpush1.msra.mxu0 0.0
        %1873 = vmatprep.subr.mxu0 0.0
        %1874 = vmatpush1.msra.mxu0 0.0
        %1875 = vmatprep.subr.mxu0 0.0
        %1876 = vmatpush1.msra.mxu0 0.0
        %1877 = vmatprep.subr.mxu0 0.0
        %1878 = vmatpush1.msra.mxu0 0.0
        %1879 = vmatprep.subr.mxu0 0.0
        %1880 = vmatpush1.msra.mxu0 0.0
        %1881 = vmatprep.subr.mxu0 0.0
        %1882 = vmatpush1.msra.mxu0 0.0
        %1883 = vmatprep.subr.mxu0 0.0
        %1884 = vmatpush1.msra.mxu0 0.0
        %1885 = vmatprep.subr.mxu0 0.0
        %1886 = vmatpush1.msra.mxu0 0.0
        %1887 = vmatprep.subr.mxu0 0.0
        %1888 = vmatpush1.msra.mxu0 0.0
        %1889 = vmatprep.subr.mxu0 0.0
        %1890 = vmatpush1.msra.mxu0 0.0
        %1891 = vmatprep.subr.mxu0 0.0
        %1892 = vmatpush1.msra.mxu0 0.0
        %1893 = vmatprep.subr.mxu0 0.0
        %1894 = vmatpush1.msra.mxu0 0.0
        %1895 = vmatprep.subr.mxu0 0.0
        %1896 = vmatpush1.msra.mxu0 0.0
        %1897 = vmatprep.subr.mxu0 0.0
        %1898 = vmatpush1.msra.mxu0 0.0
        %1899 = vmatprep.subr.mxu0 0.0
        %1900 = vmatpush1.msra.mxu0 0.0
        %1901 = vmatprep.subr.mxu0 0.0
        %1902 = vmatpush1.msra.mxu0 0.0
        %1903 = vmatprep.subr.mxu0 0.0
        %1904 = vmatpush1.msra.mxu0 0.0
        %1905 = vmatprep.subr.mxu0 0.0
        %1906 = vmatpush1.msra.mxu0 0.0
        %1907 = vmatprep.subr.mxu0 0.0
        %1908 = vmatpush1.msra.mxu0 0.0
        %1909 = vmatprep.subr.mxu0 0.0
        %1910 = vmatpush1.msra.mxu0 0.0
        %1911 = vmatprep.subr.mxu0 0.0
        %1912 = vmatpush1.msra.mxu0 0.0
        %1913 = vmatprep.subr.mxu0 0.0
        %1914 = vmatpush1.msra.mxu0 0.0
        %1915 = vmatprep.subr.mxu0 0.0
        %1916 = vmatpush1.msra.mxu0 0.0
        %1917 = vmatprep.subr.mxu0 0.0
        %1918 = vmatpush1.msra.mxu0 0.0
        %1919 = vmatprep.mubr.f32.mxu0 0.0
        %1920 = vmatmul.mubr.f32.gmra.mrb[0].mxu0 %v1851
        %v1921 = vpop.f32.mrb[0].mxu0
        %v1922 = vadd.f32 %v1843, %v1921
        %v1923 = vpop.f32.mrb[0].mxu0
        %v1924 = vadd.f32 %v1843, %v1923
        %1925 = vmatprep.mubr.f32.mxu0 0.0
        %1926 = vmatmul.mubr.f32.gmra.mrb[0].mxu0 %v1853
        %v1927 = vpop.f32.mrb[0].mxu0
        %v1928 = vadd.f32 %v1848, %v1927
        %v1929 = vpop.f32.mrb[0].mxu0
        %v1930 = vadd.f32 %v1848, %v1929
        %1931 = vdwg.mxu0
        %1932 = vmatprep.subr.mxu0 %v1827
        %1933 = vmatpush1.msra.mxu0 %v1826
        %1934 = vmatprep.subr.mxu0 %v1831
        %1935 = vmatpush1.msra.mxu0 %v1830
        %1936 = vmatprep.subr.mxu0 %v1835
        %1937 = vmatpush1.msra.mxu0 %v1834
        %1938 = vmatprep.subr.mxu0 %v1839
        %1939 = vmatpush1.msra.mxu0 %v1838
        %1940 = vmatprep.subr.mxu0 0.0
        %1941 = vmatpush1.msra.mxu0 0.0
        %1942 = vmatprep.subr.mxu0 0.0
        %1943 = vmatpush1.msra.mxu0 0.0
        %1944 = vmatprep.subr.mxu0 0.0
        %1945 = vmatpush1.msra.mxu0 0.0
        %1946 = vmatprep.subr.mxu0 0.0
        %1947 = vmatpush1.msra.mxu0 0.0
        %1948 = vmatprep.subr.mxu0 0.0
        %1949 = vmatpush1.msra.mxu0 0.0
        %1950 = vmatprep.subr.mxu0 0.0
        %1951 = vmatpush1.msra.mxu0 0.0
        %1952 = vmatprep.subr.mxu0 0.0
        %1953 = vmatpush1.msra.mxu0 0.0
        %1954 = vmatprep.subr.mxu0 0.0
        %1955 = vmatpush1.msra.mxu0 0.0
        %1956 = vmatprep.subr.mxu0 0.0
        %1957 = vmatpush1.msra.mxu0 0.0
        %1958 = vmatprep.subr.mxu0 0.0
        %1959 = vmatpush1.msra.mxu0 0.0
        %1960 = vmatprep.subr.mxu0 0.0
        %1961 = vmatpush1.msra.mxu0 0.0
        %1962 = vmatprep.subr.mxu0 0.0
        %1963 = vmatpush1.msra.mxu0 0.0
        %1964 = vmatprep.subr.mxu0 0.0
        %1965 = vmatpush1.msra.mxu0 0.0
        %1966 = vmatprep.subr.mxu0 0.0
        %1967 = vmatpush1.msra.mxu0 0.0
        %1968 = vmatprep.subr.mxu0 0.0
        %1969 = vmatpush1.msra.mxu0 0.0
        %1970 = vmatprep.subr.mxu0 0.0
        %1971 = vmatpush1.msra.mxu0 0.0
        %1972 = vmatprep.subr.mxu0 0.0
        %1973 = vmatpush1.msra.mxu0 0.0
        %1974 = vmatprep.subr.mxu0 0.0
        %1975 = vmatpush1.msra.mxu0 0.0
        %1976 = vmatprep.subr.mxu0 0.0
        %1977 = vmatpush1.msra.mxu0 0.0
        %1978 = vmatprep.subr.mxu0 0.0
        %1979 = vmatpush1.msra.mxu0 0.0
        %1980 = vmatprep.subr.mxu0 0.0
        %1981 = vmatpush1.msra.mxu0 0.0
        %1982 = vmatprep.subr.mxu0 0.0
        %1983 = vmatpush1.msra.mxu0 0.0
        %1984 = vmatprep.subr.mxu0 0.0
        %1985 = vmatpush1.msra.mxu0 0.0
        %1986 = vmatprep.subr.mxu0 0.0
        %1987 = vmatpush1.msra.mxu0 0.0
        %1988 = vmatprep.subr.mxu0 0.0
        %1989 = vmatpush1.msra.mxu0 0.0
        %1990 = vmatprep.subr.mxu0 0.0
        %1991 = vmatpush1.msra.mxu0 0.0
        %1992 = vmatprep.subr.mxu0 0.0
        %1993 = vmatpush1.msra.mxu0 0.0
        %1994 = vmatprep.subr.mxu0 0.0
        %1995 = vmatpush1.msra.mxu0 0.0
        %1996 = vmatprep.mubr.f32.mxu0 0.0
        %1997 = vmatmul.mubr.f32.gmra.mrb[0].mxu0 %v1851
        %v1998 = vpop.f32.mrb[0].mxu0
        %v1999 = vadd.f32 %v1843, %v1998
        %v2000 = vpop.f32.mrb[0].mxu0
        %v2001 = vadd.f32 %v1843, %v2000
        %2002 = vmatprep.mubr.f32.mxu0 0.0
        %2003 = vmatmul.mubr.f32.gmra.mrb[0].mxu0 %v1853
        %v2004 = vpop.f32.mrb[0].mxu0
        %v2005 = vadd.f32 %v1848, %v2004
        %v2006 = vpop.f32.mrb[0].mxu0
        %v2007 = vadd.f32 %v1848, %v2006
        %2008 = vdwg.mxu0
        %v2009 = vmax.f32 %v1922, 0.0
        %v2010 = vmax.f32 %v1924, 0.0
        %v2011 = vmax.f32 %v1999, 0.0
        %v2012 = vmax.f32 %v2001, 0.0
        %v2013 = vmax.f32 %v1928, 0.0
        %v2014 = vmax.f32 %v1930, 0.0
        %v2015 = vmax.f32 %v2005, 0.0
        %v2016 = vmax.f32 %v2007, 0.0
        %2018 = vset.pattern.permute.xlu0 0
        %2019 = vperm.xlu0 %2018, %v278
        %v2020 = vpop.permute.xlu0 %2019
        %2023 = vset.pattern.permute.xlu0 0
        %2024 = vperm.xlu0 %2023, %v279
        %v2025 = vpop.permute.xlu0 %2024
        %v2027 = vmul.f32 %v2009, %v2020
        %v2028 = vmul.f32 %v2010, %v2020
        %v2029 = vmul.f32 %v2011, %v2020
        %v2030 = vmul.f32 %v2012, %v2020
        %v2031 = vmul.f32 %v2013, %v2025
        %v2032 = vmul.f32 %v2014, %v2025
        %v2033 = vmul.f32 %v2015, %v2025
        %v2034 = vmul.f32 %v2016, %v2025
        %v2035 = vadd.f32 %v2027, %v2031
        %v2036 = vrot.slane %v2035, 4
        %v2037 = vadd.f32 %v2035, %v2036
        %v2038 = vrot.slane %v2037, 2
        %v2039 = vadd.f32 %v2037, %v2038
        %v2040 = vrot.slane %v2039, 1
        %v2041 = vadd.f32 %v2039, %v2040
        %v2042 = vadd.f32 %v2028, %v2032
        %v2043 = vrot.slane %v2042, 4
        %v2044 = vadd.f32 %v2042, %v2043
        %v2045 = vrot.slane %v2044, 2
        %v2046 = vadd.f32 %v2044, %v2045
        %v2047 = vrot.slane %v2046, 1
        %v2048 = vadd.f32 %v2046, %v2047
        %v2049 = vadd.f32 %v2029, %v2033
        %v2050 = vrot.slane %v2049, 4
        %v2051 = vadd.f32 %v2049, %v2050
        %v2052 = vrot.slane %v2051, 2
        %v2053 = vadd.f32 %v2051, %v2052
        %v2054 = vrot.slane %v2053, 1
        %v2055 = vadd.f32 %v2053, %v2054
        %v2056 = vadd.f32 %v2030, %v2034
        %v2057 = vrot.slane %v2056, 4
        %v2058 = vadd.f32 %v2056, %v2057
        %v2059 = vrot.slane %v2058, 2
        %v2060 = vadd.f32 %v2058, %v2059
        %v2061 = vrot.slane %v2060, 1
        %v2062 = vadd.f32 %v2060, %v2061
        %2064 = vset.pattern.permute.xlu0 1
        %2065 = vperm.xlu0 %2064, %v280
        %v2066 = vpop.permute.xlu0 %2065
        %v2068 = vadd.f32 %v2041, %v2066
        %v2069 = vadd.f32 %v2048, %v2066
        %v2070 = vadd.f32 %v2055, %v2066
        %v2071 = vadd.f32 %v2062, %v2066
        %v2072 = vtanh.pop %v2068
        %v2073 = vtanh.pop %v2069
        %v2074 = vtanh.pop %v2070
        %v2075 = vtanh.pop %v2071
        %v2080 = vcombine.low %v2072, %v2073
        %v2081 = vcombine.low %v2074, %v2075
        %v2083 = vunpack.c.l.s4 1966171168
        %v2084 = vunpack.c.0.s8 %v2083
        %v2085 = vlaneseq
        %v2086 = vshrl.u32 %v2085, 7
        %v2087 = vsub.s32 %v2084, %v2086
        %v2088 = vrot.slane %v2080, %v2087
        %v2090 = vunpack.c.l.s4 1966171168
        %v2091 = vunpack.c.0.s8 %v2090
        %v2092 = vlaneseq
        %v2093 = vshrl.u32 %v2092, 7
        %v2094 = vsub.s32 %v2091, %v2093
        %v2095 = vrot.slane %v2081, %v2094
        %v2096 = vcombine.low %v2088, %v2095
        %v2098 = vunpack.c.l.s4 1966171168
        %v2099 = vunpack.c.0.s8 %v2098
        %v2100 = vlaneseq
        %v2101 = vshrl.u32 %v2100, 7
        %v2102 = vsub.s32 %v2099, %v2101
        %v2103 = vrot.slane %v2096, %v2102
        %v2105 = vlaneseq
        %vm2106 = vcmp.ge.s32.totalorder %v2105, 0
        %vm2107 = vcmp.lt.s32.totalorder %v2105, 512
        %vm2108 = vmand %vm2106, %vm2107
        %2109 = vst.msk [vmem:[%s201] sm:$0xf] %vm2108, %v2103
        %s2110 = smul.u32 4, %s13
        %p2111 = scmp.lt.s32.totalorder %s2110, 7
        %s2112 = scalar_select %p2111, %s2110, 7
        %s2113 = scalar_lea.vmem %s2, %s2112
        // Predicated region
        $region67: #{draw_action_forward_batch.1} parent=61 // pred_check
          %p2114 = pneg %p78
        $region68: #{draw_action_forward_batch.1} parent=61 // pred_check_branch
          %2116 = sbr.rel (%p2114) target = $region70
        $region69: #{draw_action_forward_batch.1} parent=61 // pred_region
          %s2117 = smul.u32 4, %s13
        $region70: #{draw_action_forward_batch.1} parent=61 // pred_fallthru
          _
      $region62: #{draw_action_forward_batch.1} parent=5 // pred_fallthru
        _
      %p2118 = scmp.le.s32.totalorder 2, %s8
      // Predicated region
      $region71: #{draw_action_forward_batch.1} parent=5 // pred_check
        %p2119 = pneg %p2118
      $region72: #{draw_action_forward_batch.1} parent=5 // pred_check_branch
        %2121 = sbr.rel (%p2119) target = $region74
      $region73: #{draw_action_forward_batch.1} parent=5 // pred_region
        %s2122 = ssub.s32 %s8, 2
        // Predicated region
        $region75: #{draw_action_forward_batch.1} parent=73 // pred_check
          %p2123 = pneg %p84
        $region76: #{draw_action_forward_batch.1} parent=73 // pred_check_branch
          %2125 = sbr.rel (%p2123) target = $region78
        $region77: #{draw_action_forward_batch.1} parent=73 // pred_region
          %s2126 = smul.u32 4, %s14
          %p2127 = scmp.lt.s32.totalorder %s2126, 7
          %s2128 = scalar_select %p2127, %s2126, 7
          %s2129 = scalar_lea.vmem %s2, %s2128
        $region78: #{draw_action_forward_batch.1} parent=73 // pred_fallthru
          _
      $region74: #{draw_action_forward_batch.1} parent=5 // pred_fallthru
        _
    $region6: #{draw_action_forward_batch.1} parent=1 // loop_footer
      %s12 = sadd.s32 1, %s8
    $region7: #{draw_action_forward_batch.1} parent=1 // loop_footer_branch
      %7 = sbr.rel target = $region3
    $region8: #{draw_action_forward_batch.1} parent=1 // loop_exit
      _

</llo_original>
